<compile_context>
chip_gen: v7x
topology: tpu7x:2x2x1
jax: 0.10.0
libtpu: 0.0.40
codegen_flags: <defaults>
</compile_context>

<pallas_src>
import math
import numpy as np
import jax
import jax.numpy as jnp
from jax.experimental import pallas as pl
from jax.experimental.pallas import tpu as pltpu

BN_EPS = 1e-5
GEM_EPS = 1e-6

# Per-stage static configuration.
CH      = (16, 16, 32, 32, 64, 64)     # Cout
CIN     = (1, 16, 16, 32, 32, 64)      # Cin
KS      = (5, 5, 3, 3, 3, 3)           # kernel size
PAD     = (1, 1, 1, 1, 1, 0)           # conv padding
HAS_GEM = (False, True, False, True, False, False)
CH_OFF  = (0, 16, 32, 64, 96, 160)     # row offsets into the packed buffers
C_TOTAL = 224                          # sum(CH)
KC_MAX  = 192                          # max(K*Cin) = 3*64


def _stage_lengths(L):
    """Input length of every stage (PyTorch Conv1d / avg_pool1d rules) + final length."""
    lens = []
    cur = L
    for i in range(6):
        lens.append(cur)
        cur = cur + 2 * PAD[i] - KS[i] + 1          # conv
        if HAS_GEM[i]:
            cur = cur // 2                          # avg_pool1d(kernel=2), floor
    return lens, cur


# ----------------------------- kernel body ---------------------------------

def make_kernel(B, L, use_im2col):
    """Fused forward kernel for static batch-block B, input length L."""
    lin_list, _ = _stage_lengths(L)

    def silu(v):
        # exp + reciprocal both go to the EUP slot.
        return v * pl.reciprocal(1.0 + jnp.exp(-v), approx=True)

    def kernel(x_ref, w_ref, a_ref, p_ref, pool2_ref, pool4_ref, o_ref, act_ref):
        pools = (None, pool2_ref, None, pool4_ref, None, None)
        p_gem = (None, p_ref[0], None, p_ref[1], None, None)

        h = x_ref[...]                                    # (1, L*B) f32
        for i in range(6):
            cin, cout, k, pad = CIN[i], CH[i], KS[i], PAD[i]
            off = CH_OFF[i]
            lin = lin_list[i]
            lout = lin + 2 * pad - k + 1

            if i == 0:
                # Cin == 1: rank-1 taps on the VPU; the (1, L*B) pad concat is tiny.
                z = jnp.zeros((1, pad * B), jnp.float32)
                hp = jnp.concatenate([z, h, z], axis=1)
                w1 = w_ref[off:off + cout, 0:k].astype(jnp.float32)      # (cout, k)
                acc = jnp.zeros((cout, lout * B), jnp.float32)
                for kk in range(k):
                    acc = acc + w1[:, kk:kk + 1] * hp[:, kk * B:kk * B + lout * B]
                h = acc
            else:
                if pad > 0:
                    # Halo scratch: zero the pad columns, store the activation as bf16,
                    # and read tap windows straight from the ref (no concatenates).
                    act_ref[0:cin, 0:pad * B] = jnp.zeros((cin, pad * B), jnp.bfloat16)
                    act_ref[0:cin, (pad + lin) * B:(2 * pad + lin) * B] = (
                        jnp.zeros((cin, pad * B), jnp.bfloat16))
                    act_ref[0:cin, pad * B:(pad + lin) * B] = h.astype(jnp.bfloat16)
                    taps = [act_ref[0:cin, kk * B:kk * B + lout * B] for kk in range(k)]
                else:
                    hb = h.astype(jnp.bfloat16)
                    taps = [hb[:, kk * B:kk * B + lout * B] for kk in range(k)]
                if use_im2col:
                    # One deep matmul: (Cout, K*Cin) x (K*Cin, Lout*B).
                    rhs = jnp.concatenate(taps, axis=0)
                    h = jnp.dot(w_ref[off:off + cout, 0:k * cin], rhs,
                                preferred_element_type=jnp.float32)
                else:
                    # K accumulated per-tap matmuls (v5e: 128-deep MXU, skip the concat).
                    h = jnp.dot(w_ref[off:off + cout, 0:cin], taps[0],
                                preferred_element_type=jnp.float32)
                    for kk in range(1, k):
                        h = h + jnp.dot(
                            w_ref[off:off + cout, kk * cin:(kk + 1) * cin], taps[kk],
                            preferred_element_type=jnp.float32)

            blk = a_ref[off:off + cout, :]                # (cout, 3): bias, scale, shift
            if HAS_GEM[i]:
                h = h + blk[:, 0:1]                       # conv bias (needed before GeM)
                p = p_gem[i]
                xc = jnp.maximum(h, GEM_EPS)              # clamp(min=eps)
                xpow = jnp.exp(p * jnp.log(xc))           # x^p (x > 0)
                pooled = jnp.dot(xpow.astype(jnp.bfloat16), pools[i][...],
                                 preferred_element_type=jnp.float32)
                h = jnp.exp(jnp.log(pooled) / p)          # ^(1/p)
            # BatchNorm affine (+ folded bias for non-GeM stages) + SiLU.
            h = silu(h * blk[:, 1:2] + blk[:, 2:3])

        o_ref[0] = h.astype(o_ref.dtype)                  # lane-dense (64, L6*B) slab

    return kernel


# ----------------------------- parameters ----------------------------------

def make_params(key):
    keys = jax.random.split(key, 12)
    w_pack = jnp.zeros((C_TOTAL, KC_MAX), jnp.float32)
    a_pack = jnp.zeros((C_TOTAL, 3), jnp.float32)
    for i in range(6):
        cout, cin, k = CH[i], CIN[i], KS[i]
        off = CH_OFF[i]
        kw, kb = jax.random.split(keys[2 * i])
        bound = 1.0 / math.sqrt(cin * k)
        w = jax.random.uniform(kw, (cout, cin, k), jnp.float32, -bound, bound)
        b = jax.random.uniform(kb, (cout,), jnp.float32, -bound, bound)
        # (Cout, Cin, K) -> (Cout, K, Cin) -> (Cout, K*Cin): col = kk*Cin + ci
        wf = jnp.transpose(w, (0, 2, 1)).reshape(cout, k * cin)
        w_pack = w_pack.at[off:off + cout, 0:k * cin].set(wf)

        k1, k2, k3, k4 = jax.random.split(keys[2 * i + 1], 4)
        gamma = 1.0 + 0.1 * jax.random.normal(k1, (cout,), jnp.float32)
        beta = 0.1 * jax.random.normal(k2, (cout,), jnp.float32)
        mean = 0.1 * jax.random.normal(k3, (cout,), jnp.float32)
        var = 1.0 + 0.1 * jax.random.uniform(k4, (cout,), jnp.float32)
        scale = gamma / jnp.sqrt(var + BN_EPS)
        if HAS_GEM[i]:
            bias_col = b                                  # added in-kernel before GeM
            shift = beta - mean * scale
        else:
            bias_col = jnp.zeros_like(b)                  # folded into the BN shift
            shift = beta + (b - mean) * scale
        a_pack = a_pack.at[off:off + cout, 0].set(bias_col)
        a_pack = a_pack.at[off:off + cout, 1].set(scale)
        a_pack = a_pack.at[off:off + cout, 2].set(shift)

    gem_p = jnp.full((2,), 3.0, jnp.float32)              # GeM p (init = 3) for stages 2 & 4
    return [w_pack, a_pack, gem_p]


# ------------------------------ wrapper -------------------------------------

def _pool_matrix(lc, B):
    """avg_pool1d(kernel=2) as a (lc*B, lp*B) bf16 matrix for the pos-major layout."""
    lp = lc // 2
    r = np.arange(lc * B)[:, None]
    c = np.arange(lp * B)[None, :]
    m = ((r % B) == (c % B)) & ((r // (2 * B)) == (c // B))
    return jnp.asarray(np.where(m, 0.5, 0.0).astype(np.float32), jnp.bfloat16)


def _device_config():
    kind = ""
    try:
        kind = (jax.devices()[0].device_kind or "").lower()
    except Exception:
        pass
    n_cores = 2 if "v7" in kind else 1          # v7x: 2 TensorCores per chip
    use_im2col = "v5" not in kind               # v5e: per-tap matmuls instead
    return n_cores, use_im2col


def _pick_batch_block(N, n_cores):
    """Largest power-of-two batch block (cap 32) balancing padding vs per-step overhead."""
    cap, ovh = 32, 8
    best, best_cost = 1, None
    b = 1
    while b <= cap:
        steps = -(-N // b)
        cost = steps * (b + ovh)
        if best_cost is None or cost < best_cost or (cost == best_cost and b > best):
            best, best_cost = b, cost
        b *= 2
    # On 2-TC parts prefer >= 2 grid steps, but only after B is already large.
    if n_cores >= 2 and -(-N // best) == 1 and best >= 16:
        best //= 2
    return best


@jax.jit
def cnn1d_middle_forward(x, params):
    w_pack, a_pack, gem_p = params
    N, Cin, L = x.shape
    lin_list, L6 = _stage_lengths(L)
    L2c = lin_list[1] + 2 * PAD[1] - KS[1] + 1            # conv2 output length (GeM #1)
    L4c = lin_list[3] + 2 * PAD[3] - KS[3] + 1            # conv4 output length (GeM #2)

    n_cores, use_im2col = _device_config()
    B = _pick_batch_block(N, n_cores)
    G = -(-N // B)
    Np = G * B
    if Np != N:
        x = jnp.concatenate([x, jnp.zeros((Np - N, Cin, L), x.dtype)], axis=0)

    # (Np, 1, L) -> (G, L*B), column index = position*B + sample.
    x_lm = jnp.transpose(x.reshape(G, B, L), (0, 2, 1)).reshape(G, L * B)
    w_bf = w_pack.astype(jnp.bfloat16)
    pool2 = _pool_matrix(L2c, B)
    pool4 = _pool_matrix(L4c, B)

    # Halo scratch (stages with pad > 0 and Cin > 1), bf16.
    scr_rows = max(CIN[i] for i in range(1, 6) if PAD[i] > 0)
    scr_cols = max((lin_list[i] + 2 * PAD[i]) * B for i in range(1, 6) if PAD[i] > 0)

    # Advisory cost estimate (per full call).
    flops, trans = 0, 0
    for i in range(6):
        lout = lin_list[i] + 2 * PAD[i] - KS[i] + 1
        flops += 2 * CH[i] * CIN[i] * KS[i] * lout * B
        trans += 2 * CH[i] * lout * B                      # SiLU exp + reciprocal
        if HAS_GEM[i]:
            lp = lout // 2
            flops += 2 * CH[i] * (lout * B) * (lp * B)     # pooling matmul
            trans += 2 * CH[i] * lout * B + 2 * CH[i] * lp * B
    flops *= G
    trans *= G
    bytes_accessed = (x_lm.size * 4 + w_bf.size * 2 + a_pack.size * 4 +
                      pool2.size * 2 + pool4.size * 2 + G * 64 * L6 * B * 4)

    out = pl.pallas_call(
        make_kernel(B, L, use_im2col),
        out_shape=jax.ShapeDtypeStruct((G, 64, L6 * B), jnp.float32),
        grid=(G,),
        in_specs=[
            pl.BlockSpec((1, L * B), lambda g: (g, 0)),
            pl.BlockSpec(w_bf.shape, lambda g: (0, 0)),
            pl.BlockSpec(a_pack.shape, lambda g: (0, 0)),
            pl.BlockSpec(memory_space=pltpu.MemorySpace.SMEM),
            pl.BlockSpec(pool2.shape, lambda g: (0, 0)),
            pl.BlockSpec(pool4.shape, lambda g: (0, 0)),
        ],
        out_specs=pl.BlockSpec((1, 64, L6 * B), lambda g: (g, 0, 0)),
        scratch_shapes=[pltpu.VMEM((scr_rows, scr_cols), jnp.bfloat16)],
        compiler_params=pltpu.CompilerParams(
            dimension_semantics=("parallel",),
            vmem_limit_bytes=32 * 1024 * 1024),
        cost_estimate=pl.CostEstimate(
            flops=int(flops), transcendentals=int(trans),
            bytes_accessed=int(bytes_accessed)),
    )(x_lm, w_bf, a_pack, gem_p, pool2, pool4)

    # (G, 64, L6*B) -> (Np, 64, L6): un-interleave batch from lanes.
    out = out.reshape(G, 64, L6, B).transpose(0, 3, 1, 2).reshape(Np, 64, L6)
    return out[:N]


if __name__ == "__main__":
    key = jax.random.PRNGKey(0)
    kx, kp = jax.random.split(key)
    N, L = 2, 64                       # batch=2, 1 input channel, seq length 64
    x = jax.random.normal(kx, (N, 1, L), jnp.float32)
    params = make_params(kp)

    out = cnn1d_middle_forward(x, params)
    out = jax.block_until_ready(out)

    expected_L = _stage_lengths(L)[1]
    assert out.shape == (N, 64, expected_L), out.shape
    assert bool(jnp.all(jnp.isfinite(out)))
    print("KERNEL_OK")
</pallas_src>

<mosaic_0001>
module attributes {stable_mosaic.version = 11 : i64} {
  func.func @kernel(%arg0: i32, %arg1: memref<1x128xf32, #tpu.memory_space<vmem>>, %arg2: memref<224x192xbf16, #tpu.memory_space<vmem>>, %arg3: memref<224x3xf32, #tpu.memory_space<vmem>>, %arg4: memref<2xf32, #tpu.memory_space<smem>>, %arg5: memref<120x60xbf16, #tpu.memory_space<vmem>>, %arg6: memref<60x30xbf16, #tpu.memory_space<vmem>>, %arg7: memref<1x64x26xf32, #tpu.memory_space<vmem>>, %arg8: memref<32x128xbf16, #tpu.memory_space<vmem>>) attributes {dimension_semantics = [#tpu.dimension_semantics<parallel>], iteration_bounds = array<i64: 1>, scalar_prefetch = 0 : i64, scratch_operands = 1 : i64, tpu.core_type = #tpu.core_type<tc>, window_params = [{transform_indices = @transform_0, window_bounds = array<i64: 1, 128>}, {pipeline_mode = #tpu.pipeline_mode<synchronous>, transform_indices = @transform_1, window_bounds = array<i64: 224, 192>}, {pipeline_mode = #tpu.pipeline_mode<synchronous>, transform_indices = @transform_2, window_bounds = array<i64: 224, 3>}, {transform_indices = @transform_3, window_bounds = array<i64: 2>}, {pipeline_mode = #tpu.pipeline_mode<synchronous>, transform_indices = @transform_4, window_bounds = array<i64: 120, 60>}, {pipeline_mode = #tpu.pipeline_mode<synchronous>, transform_indices = @transform_5, window_bounds = array<i64: 60, 30>}, {transform_indices = @transform_6, window_bounds = array<i64: 1, 64, 26>}]} {
    %c0 = arith.constant 0 : index
    %0 = memref.load %arg4[%c0] : memref<2xf32, #tpu.memory_space<smem>>
    %c1 = arith.constant 1 : index
    %1 = memref.load %arg4[%c1] : memref<2xf32, #tpu.memory_space<smem>>
    %c0_0 = arith.constant 0 : index
    %c0_1 = arith.constant 0 : index
    %2 = vector.load %arg1[%c0_0, %c0_1] : memref<1x128xf32, #tpu.memory_space<vmem>>, vector<1x128xf32>
    %cst = arith.constant 0.000000e+00 : f32
    %3 = vector.broadcast %cst : f32 to vector<1x2xf32>
    %4 = tpu.concatenate %3, %2, %3 in 1 : vector<1x2xf32>, vector<1x128xf32>, vector<1x2xf32> -> vector<1x132xf32>
    %c0_2 = arith.constant 0 : index
    %c0_3 = arith.constant 0 : index
    %5 = vector.load %arg2[%c0_2, %c0_3] : memref<224x192xbf16, #tpu.memory_space<vmem>>, vector<16x5xbf16>
    %6 = arith.extf %5 : vector<16x5xbf16> to vector<16x5xf32>
    %cst_4 = arith.constant 0.000000e+00 : f32
    %7 = vector.broadcast %cst_4 : f32 to vector<16x124xf32>
    %8 = vector.extract_strided_slice %6 {offsets = [0, 0], sizes = [16, 1], strides = [1, 1]} : vector<16x5xf32> to vector<16x1xf32>
    %9 = vector.extract_strided_slice %4 {offsets = [0, 0], sizes = [1, 124], strides = [1, 1]} : vector<1x132xf32> to vector<1x124xf32>
    %10 = vector.broadcast %8 : vector<16x1xf32> to vector<16x124xf32>
    %11 = vector.broadcast %9 : vector<1x124xf32> to vector<16x124xf32>
    %12 = arith.mulf %10, %11 : vector<16x124xf32>
    %13 = arith.addf %7, %12 : vector<16x124xf32>
    %14 = vector.extract_strided_slice %6 {offsets = [0, 1], sizes = [16, 1], strides = [1, 1]} : vector<16x5xf32> to vector<16x1xf32>
    %15 = vector.extract_strided_slice %4 {offsets = [0, 2], sizes = [1, 124], strides = [1, 1]} : vector<1x132xf32> to vector<1x124xf32>
    %16 = vector.broadcast %14 : vector<16x1xf32> to vector<16x124xf32>
    %17 = vector.broadcast %15 : vector<1x124xf32> to vector<16x124xf32>
    %18 = arith.mulf %16, %17 : vector<16x124xf32>
    %19 = arith.addf %13, %18 : vector<16x124xf32>
    %20 = vector.extract_strided_slice %6 {offsets = [0, 2], sizes = [16, 1], strides = [1, 1]} : vector<16x5xf32> to vector<16x1xf32>
    %21 = vector.extract_strided_slice %4 {offsets = [0, 4], sizes = [1, 124], strides = [1, 1]} : vector<1x132xf32> to vector<1x124xf32>
    %22 = vector.broadcast %20 : vector<16x1xf32> to vector<16x124xf32>
    %23 = vector.broadcast %21 : vector<1x124xf32> to vector<16x124xf32>
    %24 = arith.mulf %22, %23 : vector<16x124xf32>
    %25 = arith.addf %19, %24 : vector<16x124xf32>
    %26 = vector.extract_strided_slice %6 {offsets = [0, 3], sizes = [16, 1], strides = [1, 1]} : vector<16x5xf32> to vector<16x1xf32>
    %27 = vector.extract_strided_slice %4 {offsets = [0, 6], sizes = [1, 124], strides = [1, 1]} : vector<1x132xf32> to vector<1x124xf32>
    %28 = vector.broadcast %26 : vector<16x1xf32> to vector<16x124xf32>
    %29 = vector.broadcast %27 : vector<1x124xf32> to vector<16x124xf32>
    %30 = arith.mulf %28, %29 : vector<16x124xf32>
    %31 = arith.addf %25, %30 : vector<16x124xf32>
    %32 = vector.extract_strided_slice %6 {offsets = [0, 4], sizes = [16, 1], strides = [1, 1]} : vector<16x5xf32> to vector<16x1xf32>
    %33 = vector.extract_strided_slice %4 {offsets = [0, 8], sizes = [1, 124], strides = [1, 1]} : vector<1x132xf32> to vector<1x124xf32>
    %34 = vector.broadcast %32 : vector<16x1xf32> to vector<16x124xf32>
    %35 = vector.broadcast %33 : vector<1x124xf32> to vector<16x124xf32>
    %36 = arith.mulf %34, %35 : vector<16x124xf32>
    %37 = arith.addf %31, %36 : vector<16x124xf32>
    %c0_5 = arith.constant 0 : index
    %c0_6 = arith.constant 0 : index
    %38 = vector.load %arg3[%c0_5, %c0_6] : memref<224x3xf32, #tpu.memory_space<vmem>>, vector<16x3xf32>
    %39 = vector.extract_strided_slice %38 {offsets = [0, 1], sizes = [16, 1], strides = [1, 1]} : vector<16x3xf32> to vector<16x1xf32>
    %40 = vector.broadcast %39 : vector<16x1xf32> to vector<16x124xf32>
    %41 = arith.mulf %37, %40 : vector<16x124xf32>
    %42 = vector.extract_strided_slice %38 {offsets = [0, 2], sizes = [16, 1], strides = [1, 1]} : vector<16x3xf32> to vector<16x1xf32>
    %43 = vector.broadcast %42 : vector<16x1xf32> to vector<16x124xf32>
    %44 = arith.addf %41, %43 : vector<16x124xf32>
    %cst_7 = arith.constant 0.000000e+00 : f32
    %45 = vector.broadcast %cst_7 : f32 to vector<16x124xf32>
    %46 = arith.subf %45, %44 : vector<16x124xf32>
    %47 = math.exp %46 : vector<16x124xf32>
    %cst_8 = arith.constant 1.000000e+00 : f32
    %48 = vector.broadcast %cst_8 : f32 to vector<16x124xf32>
    %49 = arith.addf %48, %47 : vector<16x124xf32>
    %50 = tpu.reciprocal %49 {approx = true} : vector<16x124xf32> -> vector<16x124xf32>
    %51 = arith.mulf %44, %50 : vector<16x124xf32>
    %cst_9 = arith.constant 0.000000e+00 : bf16
    %52 = vector.broadcast %cst_9 : bf16 to vector<16x2xbf16>
    %c0_10 = arith.constant 0 : index
    %c0_11 = arith.constant 0 : index
    %53 = vector.load %arg8[%c0_10, %c0_11] : memref<32x128xbf16, #tpu.memory_space<vmem>>, vector<16x2xbf16>
    tpu.vector_store %arg8[%c0_10, %c0_11], %52 {strides = array<i32>} : memref<32x128xbf16, #tpu.memory_space<vmem>>, vector<16x2xbf16>,
    %cst_12 = arith.constant 0.000000e+00 : bf16
    %54 = vector.broadcast %cst_12 : bf16 to vector<16x2xbf16>
    %c0_13 = arith.constant 0 : index
    %c126 = arith.constant 126 : index
    %55 = vector.load %arg8[%c0_13, %c126] : memref<32x128xbf16, #tpu.memory_space<vmem>>, vector<16x2xbf16>
    tpu.vector_store %arg8[%c0_13, %c126], %54 {strides = array<i32>} : memref<32x128xbf16, #tpu.memory_space<vmem>>, vector<16x2xbf16>,
    %56 = arith.truncf %51 : vector<16x124xf32> to vector<16x124xbf16>
    %c0_14 = arith.constant 0 : index
    %c2 = arith.constant 2 : index
    %57 = vector.load %arg8[%c0_14, %c2] : memref<32x128xbf16, #tpu.memory_space<vmem>>, vector<16x124xbf16>
    tpu.vector_store %arg8[%c0_14, %c2], %56 {strides = array<i32>} : memref<32x128xbf16, #tpu.memory_space<vmem>>, vector<16x124xbf16>,
    %c0_15 = arith.constant 0 : index
    %c0_16 = arith.constant 0 : index
    %58 = vector.load %arg8[%c0_15, %c0_16] : memref<32x128xbf16, #tpu.memory_space<vmem>>, vector<16x120xbf16>
    %c0_17 = arith.constant 0 : index
    %c2_18 = arith.constant 2 : index
    %59 = vector.load %arg8[%c0_17, %c2_18] : memref<32x128xbf16, #tpu.memory_space<vmem>>, vector<16x120xbf16>
    %c0_19 = arith.constant 0 : index
    %c4 = arith.constant 4 : index
    %60 = vector.load %arg8[%c0_19, %c4] : memref<32x128xbf16, #tpu.memory_space<vmem>>, vector<16x120xbf16>
    %c0_20 = arith.constant 0 : index
    %c6 = arith.constant 6 : index
    %61 = vector.load %arg8[%c0_20, %c6] : memref<32x128xbf16, #tpu.memory_space<vmem>>, vector<16x120xbf16>
    %c0_21 = arith.constant 0 : index
    %c8 = arith.constant 8 : index
    %62 = vector.load %arg8[%c0_21, %c8] : memref<32x128xbf16, #tpu.memory_space<vmem>>, vector<16x120xbf16>
    %63 = tpu.concatenate %58, %59, %60, %61, %62 in 0 : vector<16x120xbf16>, vector<16x120xbf16>, vector<16x120xbf16>, vector<16x120xbf16>, vector<16x120xbf16> -> vector<80x120xbf16>
    %c16 = arith.constant 16 : index
    %c0_22 = arith.constant 0 : index
    %64 = vector.load %arg2[%c16, %c0_22] : memref<224x192xbf16, #tpu.memory_space<vmem>>, vector<16x80xbf16>
    %cst_23 = arith.constant dense<0.000000e+00> : vector<16x120xf32>
    %65 = tpu.matmul %64, %63, %cst_23 {dimension_numbers = #tpu.dot_dimension_numbers<[1], [0], [0], [1], [0, 0, 1, 1], [], []>} : vector<16x80xbf16>, vector<80x120xbf16>, vector<16x120xf32> -> vector<16x120xf32>
    %c16_24 = arith.constant 16 : index
    %c0_25 = arith.constant 0 : index
    %66 = vector.load %arg3[%c16_24, %c0_25] : memref<224x3xf32, #tpu.memory_space<vmem>>, vector<16x3xf32>
    %67 = vector.extract_strided_slice %66 {offsets = [0, 0], sizes = [16, 1], strides = [1, 1]} : vector<16x3xf32> to vector<16x1xf32>
    %68 = vector.broadcast %67 : vector<16x1xf32> to vector<16x120xf32>
    %69 = arith.addf %65, %68 : vector<16x120xf32>
    %cst_26 = arith.constant 9.99999997E-7 : f32
    %70 = vector.broadcast %cst_26 : f32 to vector<16x120xf32>
    %71 = arith.maximumf %69, %70 : vector<16x120xf32>
    %72 = math.log %71 : vector<16x120xf32>
    %73 = vector.broadcast %0 : f32 to vector<16x120xf32>
    %74 = arith.mulf %73, %72 : vector<16x120xf32>
    %75 = math.exp %74 : vector<16x120xf32>
    %76 = arith.truncf %75 : vector<16x120xf32> to vector<16x120xbf16>
    %c0_27 = arith.constant 0 : index
    %c0_28 = arith.constant 0 : index
    %77 = vector.load %arg5[%c0_27, %c0_28] : memref<120x60xbf16, #tpu.memory_space<vmem>>, vector<120x60xbf16>
    %cst_29 = arith.constant dense<0.000000e+00> : vector<16x60xf32>
    %78 = tpu.matmul %76, %77, %cst_29 {dimension_numbers = #tpu.dot_dimension_numbers<[1], [0], [0], [1], [0, 0, 1, 1], [], []>} : vector<16x120xbf16>, vector<120x60xbf16>, vector<16x60xf32> -> vector<16x60xf32>
    %79 = math.log %78 : vector<16x60xf32>
    %80 = vector.broadcast %0 : f32 to vector<16x60xf32>
    %81 = arith.divf %79, %80 : vector<16x60xf32>
    %82 = math.exp %81 : vector<16x60xf32>
    %83 = vector.extract_strided_slice %66 {offsets = [0, 1], sizes = [16, 1], strides = [1, 1]} : vector<16x3xf32> to vector<16x1xf32>
    %84 = vector.broadcast %83 : vector<16x1xf32> to vector<16x60xf32>
    %85 = arith.mulf %82, %84 : vector<16x60xf32>
    %86 = vector.extract_strided_slice %66 {offsets = [0, 2], sizes = [16, 1], strides = [1, 1]} : vector<16x3xf32> to vector<16x1xf32>
    %87 = vector.broadcast %86 : vector<16x1xf32> to vector<16x60xf32>
    %88 = arith.addf %85, %87 : vector<16x60xf32>
    %cst_30 = arith.constant 0.000000e+00 : f32
    %89 = vector.broadcast %cst_30 : f32 to vector<16x60xf32>
    %90 = arith.subf %89, %88 : vector<16x60xf32>
    %91 = math.exp %90 : vector<16x60xf32>
    %cst_31 = arith.constant 1.000000e+00 : f32
    %92 = vector.broadcast %cst_31 : f32 to vector<16x60xf32>
    %93 = arith.addf %92, %91 : vector<16x60xf32>
    %94 = tpu.reciprocal %93 {approx = true} : vector<16x60xf32> -> vector<16x60xf32>
    %95 = arith.mulf %88, %94 : vector<16x60xf32>
    %cst_32 = arith.constant 0.000000e+00 : bf16
    %96 = vector.broadcast %cst_32 : bf16 to vector<16x2xbf16>
    %c0_33 = arith.constant 0 : index
    %c0_34 = arith.constant 0 : index
    %97 = vector.load %arg8[%c0_33, %c0_34] : memref<32x128xbf16, #tpu.memory_space<vmem>>, vector<16x2xbf16>
    tpu.vector_store %arg8[%c0_33, %c0_34], %96 {strides = array<i32>} : memref<32x128xbf16, #tpu.memory_space<vmem>>, vector<16x2xbf16>,
    %cst_35 = arith.constant 0.000000e+00 : bf16
    %98 = vector.broadcast %cst_35 : bf16 to vector<16x2xbf16>
    %c0_36 = arith.constant 0 : index
    %c62 = arith.constant 62 : index
    %99 = vector.load %arg8[%c0_36, %c62] : memref<32x128xbf16, #tpu.memory_space<vmem>>, vector<16x2xbf16>
    tpu.vector_store %arg8[%c0_36, %c62], %98 {strides = array<i32>} : memref<32x128xbf16, #tpu.memory_space<vmem>>, vector<16x2xbf16>,
    %100 = arith.truncf %95 : vector<16x60xf32> to vector<16x60xbf16>
    %c0_37 = arith.constant 0 : index
    %c2_38 = arith.constant 2 : index
    %101 = vector.load %arg8[%c0_37, %c2_38] : memref<32x128xbf16, #tpu.memory_space<vmem>>, vector<16x60xbf16>
    tpu.vector_store %arg8[%c0_37, %c2_38], %100 {strides = array<i32>} : memref<32x128xbf16, #tpu.memory_space<vmem>>, vector<16x60xbf16>,
    %c0_39 = arith.constant 0 : index
    %c0_40 = arith.constant 0 : index
    %102 = vector.load %arg8[%c0_39, %c0_40] : memref<32x128xbf16, #tpu.memory_space<vmem>>, vector<16x60xbf16>
    %c0_41 = arith.constant 0 : index
    %c2_42 = arith.constant 2 : index
    %103 = vector.load %arg8[%c0_41, %c2_42] : memref<32x128xbf16, #tpu.memory_space<vmem>>, vector<16x60xbf16>
    %c0_43 = arith.constant 0 : index
    %c4_44 = arith.constant 4 : index
    %104 = vector.load %arg8[%c0_43, %c4_44] : memref<32x128xbf16, #tpu.memory_space<vmem>>, vector<16x60xbf16>
    %105 = tpu.concatenate %102, %103, %104 in 0 : vector<16x60xbf16>, vector<16x60xbf16>, vector<16x60xbf16> -> vector<48x60xbf16>
    %c32 = arith.constant 32 : index
    %c0_45 = arith.constant 0 : index
    %106 = vector.load %arg2[%c32, %c0_45] : memref<224x192xbf16, #tpu.memory_space<vmem>>, vector<32x48xbf16>
    %cst_46 = arith.constant dense<0.000000e+00> : vector<32x60xf32>
    %107 = tpu.matmul %106, %105, %cst_46 {dimension_numbers = #tpu.dot_dimension_numbers<[1], [0], [0], [1], [0, 0, 1, 1], [], []>} : vector<32x48xbf16>, vector<48x60xbf16>, vector<32x60xf32> -> vector<32x60xf32>
    %c32_47 = arith.constant 32 : index
    %c0_48 = arith.constant 0 : index
    %108 = vector.load %arg3[%c32_47, %c0_48] : memref<224x3xf32, #tpu.memory_space<vmem>>, vector<32x3xf32>
    %109 = vector.extract_strided_slice %108 {offsets = [0, 1], sizes = [32, 1], strides = [1, 1]} : vector<32x3xf32> to vector<32x1xf32>
    %110 = vector.broadcast %109 : vector<32x1xf32> to vector<32x60xf32>
    %111 = arith.mulf %107, %110 : vector<32x60xf32>
    %112 = vector.extract_strided_slice %108 {offsets = [0, 2], sizes = [32, 1], strides = [1, 1]} : vector<32x3xf32> to vector<32x1xf32>
    %113 = vector.broadcast %112 : vector<32x1xf32> to vector<32x60xf32>
    %114 = arith.addf %111, %113 : vector<32x60xf32>
    %cst_49 = arith.constant 0.000000e+00 : f32
    %115 = vector.broadcast %cst_49 : f32 to vector<32x60xf32>
    %116 = arith.subf %115, %114 : vector<32x60xf32>
    %117 = math.exp %116 : vector<32x60xf32>
    %cst_50 = arith.constant 1.000000e+00 : f32
    %118 = vector.broadcast %cst_50 : f32 to vector<32x60xf32>
    %119 = arith.addf %118, %117 : vector<32x60xf32>
    %120 = tpu.reciprocal %119 {approx = true} : vector<32x60xf32> -> vector<32x60xf32>
    %121 = arith.mulf %114, %120 : vector<32x60xf32>
    %cst_51 = arith.constant 0.000000e+00 : bf16
    %122 = vector.broadcast %cst_51 : bf16 to vector<32x2xbf16>
    %c0_52 = arith.constant 0 : index
    %c0_53 = arith.constant 0 : index
    %123 = vector.load %arg8[%c0_52, %c0_53] : memref<32x128xbf16, #tpu.memory_space<vmem>>, vector<32x2xbf16>
    tpu.vector_store %arg8[%c0_52, %c0_53], %122 {strides = array<i32>} : memref<32x128xbf16, #tpu.memory_space<vmem>>, vector<32x2xbf16>,
    %cst_54 = arith.constant 0.000000e+00 : bf16
    %124 = vector.broadcast %cst_54 : bf16 to vector<32x2xbf16>
    %c0_55 = arith.constant 0 : index
    %c62_56 = arith.constant 62 : index
    %125 = vector.load %arg8[%c0_55, %c62_56] : memref<32x128xbf16, #tpu.memory_space<vmem>>, vector<32x2xbf16>
    tpu.vector_store %arg8[%c0_55, %c62_56], %124 {strides = array<i32>} : memref<32x128xbf16, #tpu.memory_space<vmem>>, vector<32x2xbf16>,
    %126 = arith.truncf %121 : vector<32x60xf32> to vector<32x60xbf16>
    %c0_57 = arith.constant 0 : index
    %c2_58 = arith.constant 2 : index
    %127 = vector.load %arg8[%c0_57, %c2_58] : memref<32x128xbf16, #tpu.memory_space<vmem>>, vector<32x60xbf16>
    tpu.vector_store %arg8[%c0_57, %c2_58], %126 {strides = array<i32>} : memref<32x128xbf16, #tpu.memory_space<vmem>>, vector<32x60xbf16>,
    %c0_59 = arith.constant 0 : index
    %c0_60 = arith.constant 0 : index
    %128 = vector.load %arg8[%c0_59, %c0_60] : memref<32x128xbf16, #tpu.memory_space<vmem>>, vector<32x60xbf16>
    %c0_61 = arith.constant 0 : index
    %c2_62 = arith.constant 2 : index
    %129 = vector.load %arg8[%c0_61, %c2_62] : memref<32x128xbf16, #tpu.memory_space<vmem>>, vector<32x60xbf16>
    %c0_63 = arith.constant 0 : index
    %c4_64 = arith.constant 4 : index
    %130 = vector.load %arg8[%c0_63, %c4_64] : memref<32x128xbf16, #tpu.memory_space<vmem>>, vector<32x60xbf16>
    %131 = tpu.concatenate %128, %129, %130 in 0 : vector<32x60xbf16>, vector<32x60xbf16>, vector<32x60xbf16> -> vector<96x60xbf16>
    %c64 = arith.constant 64 : index
    %c0_65 = arith.constant 0 : index
    %132 = vector.load %arg2[%c64, %c0_65] : memref<224x192xbf16, #tpu.memory_space<vmem>>, vector<32x96xbf16>
    %cst_66 = arith.constant dense<0.000000e+00> : vector<32x60xf32>
    %133 = tpu.matmul %132, %131, %cst_66 {dimension_numbers = #tpu.dot_dimension_numbers<[1], [0], [0], [1], [0, 0, 1, 1], [], []>} : vector<32x96xbf16>, vector<96x60xbf16>, vector<32x60xf32> -> vector<32x60xf32>
    %c64_67 = arith.constant 64 : index
    %c0_68 = arith.constant 0 : index
    %134 = vector.load %arg3[%c64_67, %c0_68] : memref<224x3xf32, #tpu.memory_space<vmem>>, vector<32x3xf32>
    %135 = vector.extract_strided_slice %134 {offsets = [0, 0], sizes = [32, 1], strides = [1, 1]} : vector<32x3xf32> to vector<32x1xf32>
    %136 = vector.broadcast %135 : vector<32x1xf32> to vector<32x60xf32>
    %137 = arith.addf %133, %136 : vector<32x60xf32>
    %cst_69 = arith.constant 9.99999997E-7 : f32
    %138 = vector.broadcast %cst_69 : f32 to vector<32x60xf32>
    %139 = arith.maximumf %137, %138 : vector<32x60xf32>
    %140 = math.log %139 : vector<32x60xf32>
    %141 = vector.broadcast %1 : f32 to vector<32x60xf32>
    %142 = arith.mulf %141, %140 : vector<32x60xf32>
    %143 = math.exp %142 : vector<32x60xf32>
    %144 = arith.truncf %143 : vector<32x60xf32> to vector<32x60xbf16>
    %c0_70 = arith.constant 0 : index
    %c0_71 = arith.constant 0 : index
    %145 = vector.load %arg6[%c0_70, %c0_71] : memref<60x30xbf16, #tpu.memory_space<vmem>>, vector<60x30xbf16>
    %cst_72 = arith.constant dense<0.000000e+00> : vector<32x30xf32>
    %146 = tpu.matmul %144, %145, %cst_72 {dimension_numbers = #tpu.dot_dimension_numbers<[1], [0], [0], [1], [0, 0, 1, 1], [], []>} : vector<32x60xbf16>, vector<60x30xbf16>, vector<32x30xf32> -> vector<32x30xf32>
    %147 = math.log %146 : vector<32x30xf32>
    %148 = vector.broadcast %1 : f32 to vector<32x30xf32>
    %149 = arith.divf %147, %148 : vector<32x30xf32>
    %150 = math.exp %149 : vector<32x30xf32>
    %151 = vector.extract_strided_slice %134 {offsets = [0, 1], sizes = [32, 1], strides = [1, 1]} : vector<32x3xf32> to vector<32x1xf32>
    %152 = vector.broadcast %151 : vector<32x1xf32> to vector<32x30xf32>
    %153 = arith.mulf %150, %152 : vector<32x30xf32>
    %154 = vector.extract_strided_slice %134 {offsets = [0, 2], sizes = [32, 1], strides = [1, 1]} : vector<32x3xf32> to vector<32x1xf32>
    %155 = vector.broadcast %154 : vector<32x1xf32> to vector<32x30xf32>
    %156 = arith.addf %153, %155 : vector<32x30xf32>
    %cst_73 = arith.constant 0.000000e+00 : f32
    %157 = vector.broadcast %cst_73 : f32 to vector<32x30xf32>
    %158 = arith.subf %157, %156 : vector<32x30xf32>
    %159 = math.exp %158 : vector<32x30xf32>
    %cst_74 = arith.constant 1.000000e+00 : f32
    %160 = vector.broadcast %cst_74 : f32 to vector<32x30xf32>
    %161 = arith.addf %160, %159 : vector<32x30xf32>
    %162 = tpu.reciprocal %161 {approx = true} : vector<32x30xf32> -> vector<32x30xf32>
    %163 = arith.mulf %156, %162 : vector<32x30xf32>
    %cst_75 = arith.constant 0.000000e+00 : bf16
    %164 = vector.broadcast %cst_75 : bf16 to vector<32x2xbf16>
    %c0_76 = arith.constant 0 : index
    %c0_77 = arith.constant 0 : index
    %165 = vector.load %arg8[%c0_76, %c0_77] : memref<32x128xbf16, #tpu.memory_space<vmem>>, vector<32x2xbf16>
    tpu.vector_store %arg8[%c0_76, %c0_77], %164 {strides = array<i32>} : memref<32x128xbf16, #tpu.memory_space<vmem>>, vector<32x2xbf16>,
    %cst_78 = arith.constant 0.000000e+00 : bf16
    %166 = vector.broadcast %cst_78 : bf16 to vector<32x2xbf16>
    %c0_79 = arith.constant 0 : index
    %c32_80 = arith.constant 32 : index
    %167 = vector.load %arg8[%c0_79, %c32_80] : memref<32x128xbf16, #tpu.memory_space<vmem>>, vector<32x2xbf16>
    tpu.vector_store %arg8[%c0_79, %c32_80], %166 {strides = array<i32>} : memref<32x128xbf16, #tpu.memory_space<vmem>>, vector<32x2xbf16>,
    %168 = arith.truncf %163 : vector<32x30xf32> to vector<32x30xbf16>
    %c0_81 = arith.constant 0 : index
    %c2_82 = arith.constant 2 : index
    %169 = vector.load %arg8[%c0_81, %c2_82] : memref<32x128xbf16, #tpu.memory_space<vmem>>, vector<32x30xbf16>
    tpu.vector_store %arg8[%c0_81, %c2_82], %168 {strides = array<i32>} : memref<32x128xbf16, #tpu.memory_space<vmem>>, vector<32x30xbf16>,
    %c0_83 = arith.constant 0 : index
    %c0_84 = arith.constant 0 : index
    %170 = vector.load %arg8[%c0_83, %c0_84] : memref<32x128xbf16, #tpu.memory_space<vmem>>, vector<32x30xbf16>
    %c0_85 = arith.constant 0 : index
    %c2_86 = arith.constant 2 : index
    %171 = vector.load %arg8[%c0_85, %c2_86] : memref<32x128xbf16, #tpu.memory_space<vmem>>, vector<32x30xbf16>
    %c0_87 = arith.constant 0 : index
    %c4_88 = arith.constant 4 : index
    %172 = vector.load %arg8[%c0_87, %c4_88] : memref<32x128xbf16, #tpu.memory_space<vmem>>, vector<32x30xbf16>
    %173 = tpu.concatenate %170, %171, %172 in 0 : vector<32x30xbf16>, vector<32x30xbf16>, vector<32x30xbf16> -> vector<96x30xbf16>
    %c96 = arith.constant 96 : index
    %c0_89 = arith.constant 0 : index
    %174 = vector.load %arg2[%c96, %c0_89] : memref<224x192xbf16, #tpu.memory_space<vmem>>, vector<64x96xbf16>
    %cst_90 = arith.constant dense<0.000000e+00> : vector<64x30xf32>
    %175 = tpu.matmul %174, %173, %cst_90 {dimension_numbers = #tpu.dot_dimension_numbers<[1], [0], [0], [1], [0, 0, 1, 1], [], []>} : vector<64x96xbf16>, vector<96x30xbf16>, vector<64x30xf32> -> vector<64x30xf32>
    %c96_91 = arith.constant 96 : index
    %c0_92 = arith.constant 0 : index
    %176 = vector.load %arg3[%c96_91, %c0_92] : memref<224x3xf32, #tpu.memory_space<vmem>>, vector<64x3xf32>
    %177 = vector.extract_strided_slice %176 {offsets = [0, 1], sizes = [64, 1], strides = [1, 1]} : vector<64x3xf32> to vector<64x1xf32>
    %178 = vector.broadcast %177 : vector<64x1xf32> to vector<64x30xf32>
    %179 = arith.mulf %175, %178 : vector<64x30xf32>
    %180 = vector.extract_strided_slice %176 {offsets = [0, 2], sizes = [64, 1], strides = [1, 1]} : vector<64x3xf32> to vector<64x1xf32>
    %181 = vector.broadcast %180 : vector<64x1xf32> to vector<64x30xf32>
    %182 = arith.addf %179, %181 : vector<64x30xf32>
    %cst_93 = arith.constant 0.000000e+00 : f32
    %183 = vector.broadcast %cst_93 : f32 to vector<64x30xf32>
    %184 = arith.subf %183, %182 : vector<64x30xf32>
    %185 = math.exp %184 : vector<64x30xf32>
    %cst_94 = arith.constant 1.000000e+00 : f32
    %186 = vector.broadcast %cst_94 : f32 to vector<64x30xf32>
    %187 = arith.addf %186, %185 : vector<64x30xf32>
    %188 = tpu.reciprocal %187 {approx = true} : vector<64x30xf32> -> vector<64x30xf32>
    %189 = arith.mulf %182, %188 : vector<64x30xf32>
    %190 = arith.truncf %189 : vector<64x30xf32> to vector<64x30xbf16>
    %191 = vector.extract_strided_slice %190 {offsets = [0, 0], sizes = [64, 26], strides = [1, 1]} : vector<64x30xbf16> to vector<64x26xbf16>
    %192 = vector.extract_strided_slice %190 {offsets = [0, 2], sizes = [64, 26], strides = [1, 1]} : vector<64x30xbf16> to vector<64x26xbf16>
    %193 = vector.extract_strided_slice %190 {offsets = [0, 4], sizes = [64, 26], strides = [1, 1]} : vector<64x30xbf16> to vector<64x26xbf16>
    %194 = tpu.concatenate %191, %192, %193 in 0 : vector<64x26xbf16>, vector<64x26xbf16>, vector<64x26xbf16> -> vector<192x26xbf16>
    %c160 = arith.constant 160 : index
    %c0_95 = arith.constant 0 : index
    %195 = vector.load %arg2[%c160, %c0_95] : memref<224x192xbf16, #tpu.memory_space<vmem>>, vector<64x192xbf16>
    %cst_96 = arith.constant dense<0.000000e+00> : vector<64x26xf32>
    %196 = tpu.matmul %195, %194, %cst_96 {dimension_numbers = #tpu.dot_dimension_numbers<[1], [0], [0], [1], [0, 0, 1, 1], [], []>} : vector<64x192xbf16>, vector<192x26xbf16>, vector<64x26xf32> -> vector<64x26xf32>
    %c160_97 = arith.constant 160 : index
    %c0_98 = arith.constant 0 : index
    %197 = vector.load %arg3[%c160_97, %c0_98] : memref<224x3xf32, #tpu.memory_space<vmem>>, vector<64x3xf32>
    %198 = vector.extract_strided_slice %197 {offsets = [0, 1], sizes = [64, 1], strides = [1, 1]} : vector<64x3xf32> to vector<64x1xf32>
    %199 = vector.broadcast %198 : vector<64x1xf32> to vector<64x26xf32>
    %200 = arith.mulf %196, %199 : vector<64x26xf32>
    %201 = vector.extract_strided_slice %197 {offsets = [0, 2], sizes = [64, 1], strides = [1, 1]} : vector<64x3xf32> to vector<64x1xf32>
    %202 = vector.broadcast %201 : vector<64x1xf32> to vector<64x26xf32>
    %203 = arith.addf %200, %202 : vector<64x26xf32>
    %cst_99 = arith.constant 0.000000e+00 : f32
    %204 = vector.broadcast %cst_99 : f32 to vector<64x26xf32>
    %205 = arith.subf %204, %203 : vector<64x26xf32>
    %206 = math.exp %205 : vector<64x26xf32>
    %cst_100 = arith.constant 1.000000e+00 : f32
    %207 = vector.broadcast %cst_100 : f32 to vector<64x26xf32>
    %208 = arith.addf %207, %206 : vector<64x26xf32>
    %209 = tpu.reciprocal %208 {approx = true} : vector<64x26xf32> -> vector<64x26xf32>
    %210 = arith.mulf %203, %209 : vector<64x26xf32>
    %c0_101 = arith.constant 0 : index
    %c0_102 = arith.constant 0 : index
    %c0_103 = arith.constant 0 : index
    %211 = vector.load %arg7[%c0_101, %c0_102, %c0_103] : memref<1x64x26xf32, #tpu.memory_space<vmem>>, vector<1x64x26xf32>
    %212 = vector.shape_cast %211 : vector<1x64x26xf32> to vector<64x26xf32>
    %213 = vector.shape_cast %210 : vector<64x26xf32> to vector<1x64x26xf32>
    tpu.vector_store %arg7[%c0_101, %c0_102, %c0_103], %213 {strides = array<i32>} : memref<1x64x26xf32, #tpu.memory_space<vmem>>, vector<1x64x26xf32>,
    return
  }
  func.func @transform_0(%arg0: i32) -> (i32, i32) {
    %c0_i32 = arith.constant 0 : i32
    %c0_i32_0 = arith.constant 0 : i32
    return %arg0, %c0_i32 : i32, i32
  }
  func.func @transform_1(%arg0: i32) -> (i32, i32) {
    %c0_i32 = arith.constant 0 : i32
    %c0_i32_0 = arith.constant 0 : i32
    %c0_i32_1 = arith.constant 0 : i32
    return %c0_i32, %c0_i32_0 : i32, i32
  }
  func.func @transform_2(%arg0: i32) -> (i32, i32) {
    %c0_i32 = arith.constant 0 : i32
    %c0_i32_0 = arith.constant 0 : i32
    %c0_i32_1 = arith.constant 0 : i32
    return %c0_i32, %c0_i32_0 : i32, i32
  }
  func.func @transform_3(%arg0: i32) -> i32 {
    %c0_i32 = arith.constant 0 : i32
    %c0_i32_0 = arith.constant 0 : i32
    return %c0_i32 : i32
  }
  func.func @transform_4(%arg0: i32) -> (i32, i32) {
    %c0_i32 = arith.constant 0 : i32
    %c0_i32_0 = arith.constant 0 : i32
    %c0_i32_1 = arith.constant 0 : i32
    return %c0_i32, %c0_i32_0 : i32, i32
  }
  func.func @transform_5(%arg0: i32) -> (i32, i32) {
    %c0_i32 = arith.constant 0 : i32
    %c0_i32_0 = arith.constant 0 : i32
    %c0_i32_1 = arith.constant 0 : i32
    return %c0_i32, %c0_i32_0 : i32, i32
  }
  func.func @transform_6(%arg0: i32) -> (i32, i32, i32) {
    %c0_i32 = arith.constant 0 : i32
    %c0_i32_0 = arith.constant 0 : i32
    %c0_i32_1 = arith.constant 0 : i32
    return %arg0, %c0_i32, %c0_i32_0 : i32, i32, i32
  }
}

</mosaic_0001>

<llo_original>
// kernel: cnn1d_middle_forward.1
$region0: #{cnn1d_middle_forward.1}
  #allocation0 [shape = 'u32[]', space=smem, size = 0x4, offset = 0x4, fixed_abs, tag = 'smem constant byte address 0x4 - core index']
  #allocation1 [shape = 'u32[144,128]{1,0:T(1,128)}', space=vmem, size = 0x12000, scoped, tag = 'internal scratch']
  #allocation2 [shape = 'bf16[32,128]{1,0:T(16,128)(2,1)}', space=vmem, size = 0x2000, scoped, tag = 'scratch operand']
  %s0 = inlined_call_operand.vmem [shape: f32[1,128], index: 0, kind: input, shape index: {}]
  %s1 = inlined_call_operand.vmem [shape: bf16[224,192], index: 1, kind: input, shape index: {}]
  %s2 = inlined_call_operand.vmem [shape: f32[224,3], index: 2, kind: input, shape index: {}]
  %s3 = inlined_call_operand.vmem [shape: f32[2], index: 3, kind: input, shape index: {}]
  %s4 = inlined_call_operand.vmem [shape: bf16[120,60], index: 4, kind: input, shape index: {}]
  %s5 = inlined_call_operand.vmem [shape: bf16[60,30], index: 5, kind: input, shape index: {}]
  %s6 = inlined_call_operand.vmem [shape: f32[1,64,26], index: 6, kind: output, shape index: {}]
  %s7 = sld [smem:[#allocation0]]
  $region38: #{cnn1d_middle_forward.1} parent=0
    _
  %s9 = ssub.s32 1, %s7
  %s10 = scalar_select 0, %s9, %s7
  $region1: #{cnn1d_middle_forward.1} parent=0
    #allocation3 [shape = 'u8[512]{0}', space=smem, size = 0x200, scoped, tag = 'input window, operand 3, single buffered']
    #allocation4 [shape = 's32[1]{0}', space=sflag, size = 0x4, scoped, tag = 'scoped memory for cnn1d_middle_forward.1']
    %11 = vsyncpa [#allocation4], 0
    // Predicated region
    $region2: #{cnn1d_middle_forward.1} parent=1 // pred_check
      _
    $region3: #{cnn1d_middle_forward.1} parent=1 // pred_check_branch
      %13 = sbr.rel (0) target = $region5
    $region4: #{cnn1d_middle_forward.1} parent=1 // pred_region
      _
    $region5: #{cnn1d_middle_forward.1} parent=1 // pred_fallthru
      _
    // Predicated region
    $region6: #{cnn1d_middle_forward.1} parent=1 // pred_check
      _
    $region7: #{cnn1d_middle_forward.1} parent=1 // pred_check_branch
      %15 = sbr.rel (0) target = $region9
    $region8: #{cnn1d_middle_forward.1} parent=1 // pred_region
      _
    $region9: #{cnn1d_middle_forward.1} parent=1 // pred_fallthru
      _
    // Predicated region
    $region10: #{cnn1d_middle_forward.1} parent=1 // pred_check
      _
    $region11: #{cnn1d_middle_forward.1} parent=1 // pred_check_branch
      %17 = sbr.rel (0) target = $region13
    $region12: #{cnn1d_middle_forward.1} parent=1 // pred_region
      _
    $region13: #{cnn1d_middle_forward.1} parent=1 // pred_fallthru
      _
    // Predicated region
    $region14: #{cnn1d_middle_forward.1} parent=1 // pred_check
      _
    $region15: #{cnn1d_middle_forward.1} parent=1 // pred_check_branch
      %19 = sbr.rel (0) target = $region17
    $region16: #{cnn1d_middle_forward.1} parent=1 // pred_region
      %s21 = ssub.s32 16, 16
      %22 = vsyncadd [#allocation4], %s21
      %s24 = sshll.u32 %s3, 4
      %s25 = int_to_ptr.vmem [resolvable:$true] %s24
      %27 = dma.vmem_to_smem %s25, 16, [#allocation3], [#allocation4]
    $region17: #{cnn1d_middle_forward.1} parent=1 // pred_fallthru
      _
    // Predicated region
    $region18: #{cnn1d_middle_forward.1} parent=1 // pred_check
      _
    $region19: #{cnn1d_middle_forward.1} parent=1 // pred_check_branch
      %29 = sbr.rel (0) target = $region21
    $region20: #{cnn1d_middle_forward.1} parent=1 // pred_region
      _
    $region21: #{cnn1d_middle_forward.1} parent=1 // pred_fallthru
      _
    // Predicated region
    $region22: #{cnn1d_middle_forward.1} parent=1 // pred_check
      _
    $region23: #{cnn1d_middle_forward.1} parent=1 // pred_check_branch
      %31 = sbr.rel (0) target = $region25
    $region24: #{cnn1d_middle_forward.1} parent=1 // pred_region
      _
    $region25: #{cnn1d_middle_forward.1} parent=1 // pred_fallthru
      _
    // Predicated region
    $region26: #{cnn1d_middle_forward.1} parent=1 // pred_check
      _
    $region27: #{cnn1d_middle_forward.1} parent=1 // pred_check_branch
      %33 = sbr.rel (0) target = $region29
    $region28: #{cnn1d_middle_forward.1} parent=1 // pred_region
      %34 = dma.done [#allocation4], 16
    $region29: #{cnn1d_middle_forward.1} parent=1 // pred_fallthru
      _
    %35 = sfence
    %s37 = sld [smem:[#allocation3]]
    %s38 = sld [smem:[#allocation3 + $0x1]]
    %v39 = vld [vmem:[%s0] sm:$0x1]
    %v41 = vlaneseq
    %v42 = vshrl.u32 %v41, 7
    %v43 = vsub.s32 0, %v42
    %v44 = vrot.slane %v39, %v43
    %45 = vrot.lane.b32.xlu0 %v44, 2
    %v46 = vpop.permute.xlu0 %45
    %vm48 = vcmask 15360
    %v49 = vsel %vm48, 0.0, %v46
    %v50 = vsel %vm48, %v46, 0.0
    %v51 = vld [vmem:[%s1] sm:$0xf]
    %v52 = vld [vmem:[%s1 + $0x8] sm:$0xf]
    %v53 = vunpack.c.l.bf16 %v51
    %v54 = vunpack.c.l.bf16 %v52
    %56 = vset.pattern.permute.xlu0 0
    %57 = vperm.xlu0 %56, %v53
    %v58 = vpop.permute.xlu0 %57
    %61 = vset.pattern.permute.xlu0 0
    %62 = vperm.xlu0 %61, %v54
    %v63 = vpop.permute.xlu0 %62
    %v65 = vlaneseq
    %v66 = vshrl.u32 %v65, 7
    %v67 = vsub.s32 0, %v66
    %v68 = vrot.slane %v49, %v67
    %v69 = vmul.f32 %v58, %v68
    %v70 = vmul.f32 %v63, %v68
    %v71 = vadd.f32 %v69, 0.0
    %v72 = vadd.f32 %v70, 0.0
    %73 = vset.pattern.permute.xlu0 1
    %74 = vperm.xlu0 %73, %v53
    %v75 = vpop.permute.xlu0 %74
    %77 = vset.pattern.permute.xlu0 1
    %78 = vperm.xlu0 %77, %v54
    %v79 = vpop.permute.xlu0 %78
    %v81 = vmul.f32 %v75, %v68
    %v82 = vmul.f32 %v79, %v68
    %85 = vrot.lane.b32.xlu0 %v81, 126
    %v86 = vpop.permute.xlu0 %85
    %87 = vrot.lane.b32.xlu0 %v82, 126
    %v88 = vpop.permute.xlu0 %87
    %v91 = vadd.f32 %v71, %v86
    %v92 = vadd.f32 %v72, %v88
    %93 = vset.pattern.permute.xlu0 2
    %94 = vperm.xlu0 %93, %v53
    %v95 = vpop.permute.xlu0 %94
    %97 = vset.pattern.permute.xlu0 2
    %98 = vperm.xlu0 %97, %v54
    %v99 = vpop.permute.xlu0 %98
    %v101 = vmul.f32 %v95, %v68
    %v102 = vmul.f32 %v99, %v68
    %105 = vrot.lane.b32.xlu0 %v101, 124
    %v106 = vpop.permute.xlu0 %105
    %107 = vrot.lane.b32.xlu0 %v102, 124
    %v108 = vpop.permute.xlu0 %107
    %v111 = vadd.f32 %v91, %v106
    %v112 = vadd.f32 %v92, %v108
    %113 = vset.pattern.permute.xlu0 3
    %114 = vperm.xlu0 %113, %v53
    %v115 = vpop.permute.xlu0 %114
    %117 = vset.pattern.permute.xlu0 3
    %118 = vperm.xlu0 %117, %v54
    %v119 = vpop.permute.xlu0 %118
    %v121 = vlaneseq
    %v122 = vshrl.u32 %v121, 7
    %v123 = vsub.s32 0, %v122
    %v124 = vrot.slane %v50, %v123
    %v125 = vmul.f32 %v115, %v68
    %v126 = vmul.f32 %v115, %v124
    %v127 = vmul.f32 %v119, %v68
    %v128 = vmul.f32 %v119, %v124
    %133 = vrot.lane.b32.xlu0 %v125, 122
    %v134 = vpop.permute.xlu0 %133
    %135 = vrot.lane.b32.xlu0 %v126, 122
    %v136 = vpop.permute.xlu0 %135
    %137 = vrot.lane.b32.xlu0 %v127, 122
    %v138 = vpop.permute.xlu0 %137
    %139 = vrot.lane.b32.xlu0 %v128, 122
    %v140 = vpop.permute.xlu0 %139
    %vm141 = vcmask 998400
    %v142 = vsel %vm141, %v134, %v136
    %v143 = vsel %vm141, %v138, %v140
    %v146 = vadd.f32 %v111, %v142
    %v147 = vadd.f32 %v112, %v143
    %148 = vset.pattern.permute.xlu0 4
    %149 = vperm.xlu0 %148, %v53
    %v150 = vpop.permute.xlu0 %149
    %152 = vset.pattern.permute.xlu0 4
    %153 = vperm.xlu0 %152, %v54
    %v154 = vpop.permute.xlu0 %153
    %v156 = vmul.f32 %v150, %v68
    %v157 = vmul.f32 %v150, %v124
    %v158 = vmul.f32 %v154, %v68
    %v159 = vmul.f32 %v154, %v124
    %164 = vrot.lane.b32.xlu0 %v156, 120
    %v165 = vpop.permute.xlu0 %164
    %166 = vrot.lane.b32.xlu0 %v157, 120
    %v167 = vpop.permute.xlu0 %166
    %168 = vrot.lane.b32.xlu0 %v158, 120
    %v169 = vpop.permute.xlu0 %168
    %170 = vrot.lane.b32.xlu0 %v159, 120
    %v171 = vpop.permute.xlu0 %170
    %vm172 = vcmask 982016
    %v173 = vsel %vm172, %v165, %v167
    %v174 = vsel %vm172, %v169, %v171
    %v177 = vadd.f32 %v146, %v173
    %v178 = vadd.f32 %v147, %v174
    %v179 = vld [vmem:[%s2] sm:$0xff]
    %v180 = vld [vmem:[%s2 + $0x8] sm:$0xff]
    %182 = vset.pattern.permute.xlu0 1
    %183 = vperm.xlu0 %182, %v179
    %v184 = vpop.permute.xlu0 %183
    %187 = vset.pattern.permute.xlu0 1
    %188 = vperm.xlu0 %187, %v180
    %v189 = vpop.permute.xlu0 %188
    %v191 = vmul.f32 %v177, %v184
    %v192 = vmul.f32 %v178, %v189
    %193 = vset.pattern.permute.xlu0 2
    %194 = vperm.xlu0 %193, %v179
    %v195 = vpop.permute.xlu0 %194
    %197 = vset.pattern.permute.xlu0 2
    %198 = vperm.xlu0 %197, %v180
    %v199 = vpop.permute.xlu0 %198
    %v201 = vadd.f32 %v191, %v195
    %v202 = vadd.f32 %v192, %v199
    %v203 = vsub.f32 0.0, %v201
    %v204 = vsub.f32 0.0, %v202
    %v205 = vmul.f32 %v203, 1.442695
    %v206 = vpow.pop %v205
    %v207 = vmul.f32 %v204, 1.442695
    %v208 = vpow.pop %v207
    %v209 = vadd.f32 %v206, 1.0
    %v210 = vadd.f32 %v208, 1.0
    %v211 = vrcp.pop %v209
    %v212 = vrcp.pop %v210
    %v213 = vmul.f32 %v201, %v211
    %v214 = vmul.f32 %v202, %v212
    %215 = vst.msk [vmem:[#allocation2] sm:$0xff] %vm48, 0
    %vm216 = vcmask 1048560
    %217 = vst.msk [vmem:[#allocation2] sm:$0xff] %vm216, 0
    %v218 = vpack.c.bf16 %v214, %v213
    %220 = vrot.lane.b32.xlu0 %v218, 2
    %v221 = vpop.permute.xlu0 %220
    %vm223 = vcmask 1031184
    %224 = vst.msk [vmem:[#allocation2] sm:$0xff] %vm223, %v221
    %v225 = vld [vmem:[#allocation2] sm:$0xff]
    %227 = vrot.lane.b32.xlu0 %v225, 126
    %v228 = vpop.permute.xlu0 %227
    %230 = vrot.lane.b32.xlu0 %v225, 124
    %v231 = vpop.permute.xlu0 %230
    %233 = vrot.lane.b32.xlu0 %v225, 122
    %v234 = vpop.permute.xlu0 %233
    %236 = vrot.lane.b32.xlu0 %v225, 120
    %v237 = vpop.permute.xlu0 %236
    %v239 = vld [vmem:[%s1 + $0x10] sm:$0xf]
    %v240 = vld [vmem:[%s1 + $0x18] sm:$0xf]
    %v241 = vld [vmem:[%s2 + $0x10] sm:$0xff]
    %v242 = vld [vmem:[%s2 + $0x18] sm:$0xff]
    %244 = vset.pattern.permute.xlu0 0
    %245 = vperm.xlu0 %244, %v241
    %v246 = vpop.permute.xlu0 %245
    %249 = vset.pattern.permute.xlu0 0
    %250 = vperm.xlu0 %249, %v242
    %v251 = vpop.permute.xlu0 %250
    %v255 = vunpack.c.l.b16 %v239
    %v256 = vunpack.c.l.b16 %v240
    %v257 = vpack.c.b16 %v256, %v255
    %vm258 = vcmask 654336
    %v260 = vsel %vm258, %v257, 0
    %262 = vmatprep.subr.bf16.mxu0 0
    %263 = vmatpush1.bf16.msra.mxu0 %v225
    %264 = vmatprep.subr.bf16.mxu0 0
    %265 = vmatpush1.bf16.msra.mxu0 %v228
    %266 = vmatprep.subr.bf16.mxu0 0
    %267 = vmatpush1.bf16.msra.mxu0 %v231
    %268 = vmatprep.subr.bf16.mxu0 0
    %269 = vmatpush1.bf16.msra.mxu0 %v234
    %270 = vmatprep.subr.bf16.mxu0 0
    %271 = vmatpush1.bf16.msra.mxu0 %v237
    %272 = vmatprep.subr.bf16.mxu0 0
    %273 = vmatpush1.bf16.msra.mxu0 0
    %274 = vmatprep.subr.bf16.mxu0 0
    %275 = vmatpush1.bf16.msra.mxu0 0
    %276 = vmatprep.subr.bf16.mxu0 0
    %277 = vmatpush1.bf16.msra.mxu0 0
    %278 = vmatprep.subr.bf16.mxu0 0
    %279 = vmatpush1.bf16.msra.mxu0 0
    %280 = vmatprep.subr.bf16.mxu0 0
    %281 = vmatpush1.bf16.msra.mxu0 0
    %282 = vmatprep.subr.bf16.mxu0 0
    %283 = vmatpush1.bf16.msra.mxu0 0
    %284 = vmatprep.subr.bf16.mxu0 0
    %285 = vmatpush1.bf16.msra.mxu0 0
    %286 = vmatprep.subr.bf16.mxu0 0
    %287 = vmatpush1.bf16.msra.mxu0 0
    %288 = vmatprep.subr.bf16.mxu0 0
    %289 = vmatpush1.bf16.msra.mxu0 0
    %290 = vmatprep.subr.bf16.mxu0 0
    %291 = vmatpush1.bf16.msra.mxu0 0
    %292 = vmatprep.subr.bf16.mxu0 0
    %293 = vmatpush1.bf16.msra.mxu0 0
    %294 = vmatprep.mubr.bf16.mxu0 0
    %295 = vmatmul.mubr.bf16.gmra.mrb[0].mxu0 %v260
    %v296 = vpop.f32.mrb[0].mxu0
    %v297 = vadd.f32 %v246, %v296
    %v298 = vpop.f32.mrb[0].mxu0
    %v299 = vpop.f32.mrb[0].mxu0
    %v300 = vadd.f32 %v251, %v299
    %v301 = vpop.f32.mrb[0].mxu0
    %302 = vdwg.mxu0
    %v303 = vmax.f32 %v297, 1e-06
    %v304 = vmax.f32 %v300, 1e-06
    %v305 = vlog2.pop %v303
    %v306 = vmul.f32 %v305, 0.6931472
    %v307 = vlog2.pop %v304
    %v308 = vmul.f32 %v307, 0.6931472
    %v309 = vstv %s37
    %v310 = vmul.f32 %v309, %v306
    %v311 = vmul.f32 %v309, %v308
    %v312 = vmul.f32 %v310, 1.442695
    %v313 = vpow.pop %v312
    %v314 = vmul.f32 %v311, 1.442695
    %v315 = vpow.pop %v314
    %v316 = vpack.c.bf16 %v315, %v313
    %v317 = vld [vmem:[%s4] sm:$0xf]
    %v318 = vld [vmem:[%s4 + $0x4] sm:$0xf]
    %v319 = vld [vmem:[%s4 + $0x8] sm:$0xf]
    %v320 = vld [vmem:[%s4 + $0xc] sm:$0xf]
    %v321 = vld [vmem:[%s4 + $0x10] sm:$0xf]
    %v322 = vld [vmem:[%s4 + $0x14] sm:$0xf]
    %v323 = vld [vmem:[%s4 + $0x18] sm:$0xf]
    %v324 = vld [vmem:[%s4 + $0x1c] sm:$0xf]
    %v325 = vld [vmem:[%s4 + $0x20] sm:$0xf]
    %v326 = vld [vmem:[%s4 + $0x24] sm:$0xf]
    %v327 = vld [vmem:[%s4 + $0x28] sm:$0xf]
    %v328 = vld [vmem:[%s4 + $0x2c] sm:$0xf]
    %v329 = vld [vmem:[%s4 + $0x30] sm:$0xf]
    %v330 = vld [vmem:[%s4 + $0x34] sm:$0xf]
    %v331 = vld [vmem:[%s4 + $0x38] sm:$0xf]
    %v347 = vunpack.c.l.b16 %v317
    %v348 = vunpack.c.l.b16 %v318
    %v349 = vunpack.c.l.b16 %v319
    %v350 = vunpack.c.l.b16 %v320
    %v351 = vunpack.c.l.b16 %v321
    %v352 = vunpack.c.l.b16 %v322
    %v353 = vunpack.c.l.b16 %v323
    %v354 = vunpack.c.l.b16 %v324
    %v355 = vunpack.c.l.b16 %v325
    %v356 = vunpack.c.l.b16 %v326
    %v357 = vunpack.c.l.b16 %v327
    %v358 = vunpack.c.l.b16 %v328
    %v359 = vunpack.c.l.b16 %v329
    %v360 = vunpack.c.l.b16 %v330
    %v361 = vunpack.c.l.b16 %v331
    %v362 = vpack.c.b16 %v348, %v347
    %v363 = vpack.c.b16 %v350, %v349
    %v364 = vpack.c.b16 %v352, %v351
    %v365 = vpack.c.b16 %v354, %v353
    %v366 = vpack.c.b16 %v356, %v355
    %v367 = vpack.c.b16 %v358, %v357
    %v368 = vpack.c.b16 %v360, %v359
    %v369 = vpack.c.b16 %v361, %v361
    %v378 = vsel %vm172, %v316, 0
    %vm380 = vcmask 1043456
    %v382 = vsel %vm380, %v369, 0
    %384 = vmatprep.subr.bf16.mxu0 0
    %385 = vmatpush1.bf16.msra.mxu0 %v362
    %386 = vmatprep.subr.bf16.mxu0 0
    %387 = vmatpush1.bf16.msra.mxu0 %v363
    %388 = vmatprep.subr.bf16.mxu0 0
    %389 = vmatpush1.bf16.msra.mxu0 %v364
    %390 = vmatprep.subr.bf16.mxu0 0
    %391 = vmatpush1.bf16.msra.mxu0 %v365
    %392 = vmatprep.subr.bf16.mxu0 0
    %393 = vmatpush1.bf16.msra.mxu0 %v366
    %394 = vmatprep.subr.bf16.mxu0 0
    %395 = vmatpush1.bf16.msra.mxu0 %v367
    %396 = vmatprep.subr.bf16.mxu0 0
    %397 = vmatpush1.bf16.msra.mxu0 %v368
    %398 = vmatprep.subr.bf16.mxu0 0
    %399 = vmatpush1.bf16.msra.mxu0 %v382
    %400 = vmatprep.subr.bf16.mxu0 0
    %401 = vmatpush1.bf16.msra.mxu0 0
    %402 = vmatprep.subr.bf16.mxu0 0
    %403 = vmatpush1.bf16.msra.mxu0 0
    %404 = vmatprep.subr.bf16.mxu0 0
    %405 = vmatpush1.bf16.msra.mxu0 0
    %406 = vmatprep.subr.bf16.mxu0 0
    %407 = vmatpush1.bf16.msra.mxu0 0
    %408 = vmatprep.subr.bf16.mxu0 0
    %409 = vmatpush1.bf16.msra.mxu0 0
    %410 = vmatprep.subr.bf16.mxu0 0
    %411 = vmatpush1.bf16.msra.mxu0 0
    %412 = vmatprep.subr.bf16.mxu0 0
    %413 = vmatpush1.bf16.msra.mxu0 0
    %414 = vmatprep.subr.bf16.mxu0 0
    %415 = vmatpush1.bf16.msra.mxu0 0
    %416 = vmatprep.mubr.bf16.mxu0 0
    %417 = vmatmul.mubr.bf16.gmra.mrb[0].mxu0 %v378
    %v418 = vpop.f32.mrb[0].mxu0
    %v419 = vadd.f32 0.0, %v418
    %v420 = vpop.f32.mrb[0].mxu0
    %v421 = vpop.f32.mrb[0].mxu0
    %v422 = vadd.f32 0.0, %v421
    %v423 = vpop.f32.mrb[0].mxu0
    %424 = vdwg.mxu0
    %v425 = vlog2.pop %v419
    %v426 = vmul.f32 %v425, 0.6931472
    %v427 = vlog2.pop %v422
    %v428 = vmul.f32 %v427, 0.6931472
    %v429 = vrcp.pop %v309
    %v430 = vmul.f32 %v426, %v429
    %v431 = vmul.f32 %v428, %v429
    %v432 = vmul.f32 %v430, 1.442695
    %v433 = vpow.pop %v432
    %v434 = vmul.f32 %v431, 1.442695
    %v435 = vpow.pop %v434
    %436 = vset.pattern.permute.xlu0 1
    %437 = vperm.xlu0 %436, %v241
    %v438 = vpop.permute.xlu0 %437
    %440 = vset.pattern.permute.xlu0 1
    %441 = vperm.xlu0 %440, %v242
    %v442 = vpop.permute.xlu0 %441
    %v444 = vmul.f32 %v433, %v438
    %v445 = vmul.f32 %v435, %v442
    %446 = vset.pattern.permute.xlu0 2
    %447 = vperm.xlu0 %446, %v241
    %v448 = vpop.permute.xlu0 %447
    %450 = vset.pattern.permute.xlu0 2
    %451 = vperm.xlu0 %450, %v242
    %v452 = vpop.permute.xlu0 %451
    %v454 = vadd.f32 %v444, %v448
    %v455 = vadd.f32 %v445, %v452
    %v456 = vsub.f32 0.0, %v454
    %v457 = vsub.f32 0.0, %v455
    %v458 = vmul.f32 %v456, 1.442695
    %v459 = vpow.pop %v458
    %v460 = vmul.f32 %v457, 1.442695
    %v461 = vpow.pop %v460
    %v462 = vadd.f32 %v459, 1.0
    %v463 = vadd.f32 %v461, 1.0
    %v464 = vrcp.pop %v462
    %v465 = vrcp.pop %v463
    %v466 = vmul.f32 %v454, %v464
    %v467 = vmul.f32 %v455, %v465
    %468 = vst.msk [vmem:[#allocation2] sm:$0xff] %vm48, 0
    %vm469 = vcmask 523760
    %470 = vst.msk [vmem:[#allocation2] sm:$0xff] %vm469, 0
    %v471 = vpack.c.bf16 %v467, %v466
    %473 = vrot.lane.b32.xlu0 %v471, 2
    %v474 = vpop.permute.xlu0 %473
    %vm476 = vcmask 506896
    %477 = vst.msk [vmem:[#allocation2] sm:$0xff] %vm476, %v474
    %v478 = vld [vmem:[#allocation2] sm:$0xff]
    %480 = vrot.lane.b32.xlu0 %v478, 126
    %v481 = vpop.permute.xlu0 %480
    %483 = vrot.lane.b32.xlu0 %v478, 124
    %v484 = vpop.permute.xlu0 %483
    %v486 = vld [vmem:[%s1 + $0x20] sm:$0xf]
    %v487 = vld [vmem:[%s1 + $0x28] sm:$0xf]
    %v488 = vld [vmem:[%s1 + $0x30] sm:$0xf]
    %v489 = vld [vmem:[%s1 + $0x38] sm:$0xf]
    %v494 = vunpack.c.l.b16 %v486
    %v495 = vunpack.c.l.b16 %v487
    %v496 = vunpack.c.l.b16 %v488
    %v497 = vunpack.c.l.b16 %v489
    %v498 = vpack.c.b16 %v495, %v494
    %v499 = vpack.c.b16 %v497, %v496
    %vm500 = vcmask 392192
    %v502 = vsel %vm500, %v498, 0
    %v505 = vsel %vm500, %v499, 0
    %507 = vmatprep.subr.bf16.mxu0 0
    %508 = vmatpush1.bf16.msra.mxu0 %v478
    %509 = vmatprep.subr.bf16.mxu0 0
    %510 = vmatpush1.bf16.msra.mxu0 %v481
    %511 = vmatprep.subr.bf16.mxu0 0
    %512 = vmatpush1.bf16.msra.mxu0 %v484
    %513 = vmatprep.subr.bf16.mxu0 0
    %514 = vmatpush1.bf16.msra.mxu0 0
    %515 = vmatprep.subr.bf16.mxu0 0
    %516 = vmatpush1.bf16.msra.mxu0 0
    %517 = vmatprep.subr.bf16.mxu0 0
    %518 = vmatpush1.bf16.msra.mxu0 0
    %519 = vmatprep.subr.bf16.mxu0 0
    %520 = vmatpush1.bf16.msra.mxu0 0
    %521 = vmatprep.subr.bf16.mxu0 0
    %522 = vmatpush1.bf16.msra.mxu0 0
    %523 = vmatprep.subr.bf16.mxu0 0
    %524 = vmatpush1.bf16.msra.mxu0 0
    %525 = vmatprep.subr.bf16.mxu0 0
    %526 = vmatpush1.bf16.msra.mxu0 0
    %527 = vmatprep.subr.bf16.mxu0 0
    %528 = vmatpush1.bf16.msra.mxu0 0
    %529 = vmatprep.subr.bf16.mxu0 0
    %530 = vmatpush1.bf16.msra.mxu0 0
    %531 = vmatprep.subr.bf16.mxu0 0
    %532 = vmatpush1.bf16.msra.mxu0 0
    %533 = vmatprep.subr.bf16.mxu0 0
    %534 = vmatpush1.bf16.msra.mxu0 0
    %535 = vmatprep.subr.bf16.mxu0 0
    %536 = vmatpush1.bf16.msra.mxu0 0
    %537 = vmatprep.subr.bf16.mxu0 0
    %538 = vmatpush1.bf16.msra.mxu0 0
    %539 = vmatprep.mubr.bf16.mxu0 0
    %540 = vmatmul.mubr.bf16.gmra.mrb[0].mxu0 %v502
    %v541 = vpop.f32.mrb[0].mxu0
    %v542 = vadd.f32 0.0, %v541
    %v543 = vpop.f32.mrb[0].mxu0
    %v544 = vpop.f32.mrb[0].mxu0
    %v545 = vadd.f32 0.0, %v544
    %v546 = vpop.f32.mrb[0].mxu0
    %547 = vmatprep.mubr.bf16.mxu0 0
    %548 = vmatmul.mubr.bf16.gmra.mrb[0].mxu0 %v505
    %v549 = vpop.f32.mrb[0].mxu0
    %v550 = vadd.f32 0.0, %v549
    %v551 = vpop.f32.mrb[0].mxu0
    %v552 = vpop.f32.mrb[0].mxu0
    %v553 = vadd.f32 0.0, %v552
    %v554 = vpop.f32.mrb[0].mxu0
    %555 = vdwg.mxu0
    %v556 = vld [vmem:[%s2 + $0x20] sm:$0xff]
    %v557 = vld [vmem:[%s2 + $0x28] sm:$0xff]
    %v558 = vld [vmem:[%s2 + $0x30] sm:$0xff]
    %v559 = vld [vmem:[%s2 + $0x38] sm:$0xff]
    %561 = vset.pattern.permute.xlu0 1
    %562 = vperm.xlu0 %561, %v556
    %v563 = vpop.permute.xlu0 %562
    %566 = vset.pattern.permute.xlu0 1
    %567 = vperm.xlu0 %566, %v557
    %v568 = vpop.permute.xlu0 %567
    %571 = vset.pattern.permute.xlu0 1
    %572 = vperm.xlu0 %571, %v558
    %v573 = vpop.permute.xlu0 %572
    %576 = vset.pattern.permute.xlu0 1
    %577 = vperm.xlu0 %576, %v559
    %v578 = vpop.permute.xlu0 %577
    %v580 = vmul.f32 %v542, %v563
    %v581 = vmul.f32 %v545, %v568
    %v582 = vmul.f32 %v550, %v573
    %v583 = vmul.f32 %v553, %v578
    %584 = vset.pattern.permute.xlu0 2
    %585 = vperm.xlu0 %584, %v556
    %v586 = vpop.permute.xlu0 %585
    %588 = vset.pattern.permute.xlu0 2
    %589 = vperm.xlu0 %588, %v557
    %v590 = vpop.permute.xlu0 %589
    %592 = vset.pattern.permute.xlu0 2
    %593 = vperm.xlu0 %592, %v558
    %v594 = vpop.permute.xlu0 %593
    %596 = vset.pattern.permute.xlu0 2
    %597 = vperm.xlu0 %596, %v559
    %v598 = vpop.permute.xlu0 %597
    %v600 = vadd.f32 %v580, %v586
    %v601 = vadd.f32 %v581, %v590
    %v602 = vadd.f32 %v582, %v594
    %v603 = vadd.f32 %v583, %v598
    %v604 = vsub.f32 0.0, %v600
    %v605 = vsub.f32 0.0, %v601
    %v606 = vsub.f32 0.0, %v602
    %v607 = vsub.f32 0.0, %v603
    %v608 = vmul.f32 %v604, 1.442695
    %v609 = vpow.pop %v608
    %v610 = vmul.f32 %v605, 1.442695
    %v611 = vpow.pop %v610
    %v612 = vmul.f32 %v606, 1.442695
    %v613 = vpow.pop %v612
    %v614 = vmul.f32 %v607, 1.442695
    %v615 = vpow.pop %v614
    %v616 = vadd.f32 %v609, 1.0
    %v617 = vadd.f32 %v611, 1.0
    %v618 = vadd.f32 %v613, 1.0
    %v619 = vadd.f32 %v615, 1.0
    %v620 = vrcp.pop %v616
    %v621 = vrcp.pop %v617
    %v622 = vrcp.pop %v618
    %v623 = vrcp.pop %v619
    %v624 = vmul.f32 %v600, %v620
    %v625 = vmul.f32 %v601, %v621
    %v626 = vmul.f32 %v602, %v622
    %v627 = vmul.f32 %v603, %v623
    %628 = vst.msk [vmem:[#allocation2] sm:$0xff] %vm48, 0
    %629 = vst.msk [vmem:[#allocation2 + $0x8] sm:$0xff] %vm48, 0
    %630 = vst.msk [vmem:[#allocation2] sm:$0xff] %vm469, 0
    %631 = vst.msk [vmem:[#allocation2 + $0x8] sm:$0xff] %vm469, 0
    %v632 = vpack.c.bf16 %v625, %v624
    %v633 = vpack.c.bf16 %v627, %v626
    %636 = vrot.lane.b32.xlu0 %v632, 2
    %v637 = vpop.permute.xlu0 %636
    %638 = vrot.lane.b32.xlu0 %v633, 2
    %v639 = vpop.permute.xlu0 %638
    %642 = vst.msk [vmem:[#allocation2] sm:$0xff] %vm476, %v637
    %643 = vst.msk [vmem:[#allocation2 + $0x8] sm:$0xff] %vm476, %v639
    %v644 = vld [vmem:[#allocation2] sm:$0xff]
    %v645 = vld [vmem:[#allocation2 + $0x8] sm:$0xff]
    %648 = vrot.lane.b32.xlu0 %v644, 126
    %v649 = vpop.permute.xlu0 %648
    %650 = vrot.lane.b32.xlu0 %v645, 126
    %v651 = vpop.permute.xlu0 %650
    %654 = vrot.lane.b32.xlu0 %v644, 124
    %v655 = vpop.permute.xlu0 %654
    %656 = vrot.lane.b32.xlu0 %v645, 124
    %v657 = vpop.permute.xlu0 %656
    %v660 = vld [vmem:[%s1 + $0x40] sm:$0xf]
    %v661 = vld [vmem:[%s1 + $0x48] sm:$0xf]
    %v662 = vld [vmem:[%s1 + $0x50] sm:$0xf]
    %v663 = vld [vmem:[%s1 + $0x58] sm:$0xf]
    %v664 = vld [vmem:[%s2 + $0x40] sm:$0xff]
    %v665 = vld [vmem:[%s2 + $0x48] sm:$0xff]
    %v666 = vld [vmem:[%s2 + $0x50] sm:$0xff]
    %v667 = vld [vmem:[%s2 + $0x58] sm:$0xff]
    %669 = vset.pattern.permute.xlu0 0
    %670 = vperm.xlu0 %669, %v664
    %v671 = vpop.permute.xlu0 %670
    %674 = vset.pattern.permute.xlu0 0
    %675 = vperm.xlu0 %674, %v665
    %v676 = vpop.permute.xlu0 %675
    %679 = vset.pattern.permute.xlu0 0
    %680 = vperm.xlu0 %679, %v666
    %v681 = vpop.permute.xlu0 %680
    %684 = vset.pattern.permute.xlu0 0
    %685 = vperm.xlu0 %684, %v667
    %v686 = vpop.permute.xlu0 %685
    %v692 = vunpack.c.l.b16 %v660
    %v693 = vunpack.c.l.b16 %v661
    %v694 = vunpack.c.l.b16 %v662
    %v695 = vunpack.c.l.b16 %v663
    %v696 = vpack.c.b16 %v693, %v692
    %v697 = vpack.c.b16 %v695, %v694
    %vm698 = vcmask 785408
    %v700 = vsel %vm698, %v696, 0
    %v703 = vsel %vm698, %v697, 0
    %705 = vmatprep.subr.bf16.mxu0 0
    %706 = vmatpush1.bf16.msra.mxu0 %v644
    %707 = vmatprep.subr.bf16.mxu0 0
    %708 = vmatpush1.bf16.msra.mxu0 %v645
    %709 = vmatprep.subr.bf16.mxu0 0
    %710 = vmatpush1.bf16.msra.mxu0 %v649
    %711 = vmatprep.subr.bf16.mxu0 0
    %712 = vmatpush1.bf16.msra.mxu0 %v651
    %713 = vmatprep.subr.bf16.mxu0 0
    %714 = vmatpush1.bf16.msra.mxu0 %v655
    %715 = vmatprep.subr.bf16.mxu0 0
    %716 = vmatpush1.bf16.msra.mxu0 %v657
    %717 = vmatprep.subr.bf16.mxu0 0
    %718 = vmatpush1.bf16.msra.mxu0 0
    %719 = vmatprep.subr.bf16.mxu0 0
    %720 = vmatpush1.bf16.msra.mxu0 0
    %721 = vmatprep.subr.bf16.mxu0 0
    %722 = vmatpush1.bf16.msra.mxu0 0
    %723 = vmatprep.subr.bf16.mxu0 0
    %724 = vmatpush1.bf16.msra.mxu0 0
    %725 = vmatprep.subr.bf16.mxu0 0
    %726 = vmatpush1.bf16.msra.mxu0 0
    %727 = vmatprep.subr.bf16.mxu0 0
    %728 = vmatpush1.bf16.msra.mxu0 0
    %729 = vmatprep.subr.bf16.mxu0 0
    %730 = vmatpush1.bf16.msra.mxu0 0
    %731 = vmatprep.subr.bf16.mxu0 0
    %732 = vmatpush1.bf16.msra.mxu0 0
    %733 = vmatprep.subr.bf16.mxu0 0
    %734 = vmatpush1.bf16.msra.mxu0 0
    %735 = vmatprep.subr.bf16.mxu0 0
    %736 = vmatpush1.bf16.msra.mxu0 0
    %737 = vmatprep.mubr.bf16.mxu0 0
    %738 = vmatmul.mubr.bf16.gmra.mrb[0].mxu0 %v700
    %v739 = vpop.f32.mrb[0].mxu0
    %v740 = vadd.f32 %v671, %v739
    %v741 = vpop.f32.mrb[0].mxu0
    %v742 = vpop.f32.mrb[0].mxu0
    %v743 = vadd.f32 %v676, %v742
    %v744 = vpop.f32.mrb[0].mxu0
    %745 = vmatprep.mubr.bf16.mxu0 0
    %746 = vmatmul.mubr.bf16.gmra.mrb[0].mxu0 %v703
    %v747 = vpop.f32.mrb[0].mxu0
    %v748 = vadd.f32 %v681, %v747
    %v749 = vpop.f32.mrb[0].mxu0
    %v750 = vpop.f32.mrb[0].mxu0
    %v751 = vadd.f32 %v686, %v750
    %v752 = vpop.f32.mrb[0].mxu0
    %753 = vdwg.mxu0
    %v754 = vmax.f32 %v740, 1e-06
    %v755 = vmax.f32 %v743, 1e-06
    %v756 = vmax.f32 %v748, 1e-06
    %v757 = vmax.f32 %v751, 1e-06
    %v758 = vlog2.pop %v754
    %v759 = vmul.f32 %v758, 0.6931472
    %v760 = vlog2.pop %v755
    %v761 = vmul.f32 %v760, 0.6931472
    %v762 = vlog2.pop %v756
    %v763 = vmul.f32 %v762, 0.6931472
    %v764 = vlog2.pop %v757
    %v765 = vmul.f32 %v764, 0.6931472
    %v766 = vstv %s38
    %v767 = vmul.f32 %v766, %v759
    %v768 = vmul.f32 %v766, %v761
    %v769 = vmul.f32 %v766, %v763
    %v770 = vmul.f32 %v766, %v765
    %v771 = vmul.f32 %v767, 1.442695
    %v772 = vpow.pop %v771
    %v773 = vmul.f32 %v768, 1.442695
    %v774 = vpow.pop %v773
    %v775 = vmul.f32 %v769, 1.442695
    %v776 = vpow.pop %v775
    %v777 = vmul.f32 %v770, 1.442695
    %v778 = vpow.pop %v777
    %v779 = vpack.c.bf16 %v774, %v772
    %v780 = vpack.c.bf16 %v778, %v776
    %v781 = vld [vmem:[%s5] sm:$0xf]
    %v782 = vld [vmem:[%s5 + $0x4] sm:$0xf]
    %v783 = vld [vmem:[%s5 + $0x8] sm:$0xf]
    %v784 = vld [vmem:[%s5 + $0xc] sm:$0xf]
    %v785 = vld [vmem:[%s5 + $0x10] sm:$0xf]
    %v786 = vld [vmem:[%s5 + $0x14] sm:$0xf]
    %v787 = vld [vmem:[%s5 + $0x18] sm:$0xf]
    %v788 = vld [vmem:[%s5 + $0x1c] sm:$0x3]
    %v797 = vunpack.c.l.b16 %v781
    %v798 = vunpack.c.l.b16 %v782
    %v799 = vunpack.c.l.b16 %v783
    %v800 = vunpack.c.l.b16 %v784
    %v801 = vunpack.c.l.b16 %v785
    %v802 = vunpack.c.l.b16 %v786
    %v803 = vunpack.c.l.b16 %v787
    %v804 = vunpack.c.l.b16 %v788
    %v805 = vpack.c.b16 %v798, %v797
    %v806 = vpack.c.b16 %v800, %v799
    %v807 = vpack.c.b16 %v802, %v801
    %v808 = vpack.c.b16 %v804, %v803
    %vm812 = vcmask 490496
    %v814 = vsel %vm812, %v779, 0
    %v817 = vsel %vm812, %v780, 0
    %vm819 = vcmask 1045504
    %v821 = vsel %vm819, %v808, 0
    %823 = vmatprep.subr.bf16.mxu0 0
    %824 = vmatpush1.bf16.msra.mxu0 %v805
    %825 = vmatprep.subr.bf16.mxu0 0
    %826 = vmatpush1.bf16.msra.mxu0 %v806
    %827 = vmatprep.subr.bf16.mxu0 0
    %828 = vmatpush1.bf16.msra.mxu0 %v807
    %829 = vmatprep.subr.bf16.mxu0 0
    %830 = vmatpush1.bf16.msra.mxu0 %v821
    %831 = vmatprep.subr.bf16.mxu0 0
    %832 = vmatpush1.bf16.msra.mxu0 0
    %833 = vmatprep.subr.bf16.mxu0 0
    %834 = vmatpush1.bf16.msra.mxu0 0
    %835 = vmatprep.subr.bf16.mxu0 0
    %836 = vmatpush1.bf16.msra.mxu0 0
    %837 = vmatprep.subr.bf16.mxu0 0
    %838 = vmatpush1.bf16.msra.mxu0 0
    %839 = vmatprep.subr.bf16.mxu0 0
    %840 = vmatpush1.bf16.msra.mxu0 0
    %841 = vmatprep.subr.bf16.mxu0 0
    %842 = vmatpush1.bf16.msra.mxu0 0
    %843 = vmatprep.subr.bf16.mxu0 0
    %844 = vmatpush1.bf16.msra.mxu0 0
    %845 = vmatprep.subr.bf16.mxu0 0
    %846 = vmatpush1.bf16.msra.mxu0 0
    %847 = vmatprep.subr.bf16.mxu0 0
    %848 = vmatpush1.bf16.msra.mxu0 0
    %849 = vmatprep.subr.bf16.mxu0 0
    %850 = vmatpush1.bf16.msra.mxu0 0
    %851 = vmatprep.subr.bf16.mxu0 0
    %852 = vmatpush1.bf16.msra.mxu0 0
    %853 = vmatprep.subr.bf16.mxu0 0
    %854 = vmatpush1.bf16.msra.mxu0 0
    %855 = vmatprep.mubr.bf16.mxu0 0
    %856 = vmatmul.mubr.bf16.gmra.mrb[0].mxu0 %v814
    %v857 = vpop.f32.mrb[0].mxu0
    %v858 = vadd.f32 0.0, %v857
    %v859 = vpop.f32.mrb[0].mxu0
    %v860 = vpop.f32.mrb[0].mxu0
    %v861 = vadd.f32 0.0, %v860
    %v862 = vpop.f32.mrb[0].mxu0
    %863 = vmatprep.mubr.bf16.mxu0 0
    %864 = vmatmul.mubr.bf16.gmra.mrb[0].mxu0 %v817
    %v865 = vpop.f32.mrb[0].mxu0
    %v866 = vadd.f32 0.0, %v865
    %v867 = vpop.f32.mrb[0].mxu0
    %v868 = vpop.f32.mrb[0].mxu0
    %v869 = vadd.f32 0.0, %v868
    %v870 = vpop.f32.mrb[0].mxu0
    %871 = vdwg.mxu0
    %v872 = vlog2.pop %v858
    %v873 = vmul.f32 %v872, 0.6931472
    %v874 = vlog2.pop %v861
    %v875 = vmul.f32 %v874, 0.6931472
    %v876 = vlog2.pop %v866
    %v877 = vmul.f32 %v876, 0.6931472
    %v878 = vlog2.pop %v869
    %v879 = vmul.f32 %v878, 0.6931472
    %v880 = vrcp.pop %v766
    %v881 = vmul.f32 %v873, %v880
    %v882 = vmul.f32 %v875, %v880
    %v883 = vmul.f32 %v877, %v880
    %v884 = vmul.f32 %v879, %v880
    %v885 = vmul.f32 %v881, 1.442695
    %v886 = vpow.pop %v885
    %v887 = vmul.f32 %v882, 1.442695
    %v888 = vpow.pop %v887
    %v889 = vmul.f32 %v883, 1.442695
    %v890 = vpow.pop %v889
    %v891 = vmul.f32 %v884, 1.442695
    %v892 = vpow.pop %v891
    %893 = vset.pattern.permute.xlu0 1
    %894 = vperm.xlu0 %893, %v664
    %v895 = vpop.permute.xlu0 %894
    %897 = vset.pattern.permute.xlu0 1
    %898 = vperm.xlu0 %897, %v665
    %v899 = vpop.permute.xlu0 %898
    %901 = vset.pattern.permute.xlu0 1
    %902 = vperm.xlu0 %901, %v666
    %v903 = vpop.permute.xlu0 %902
    %905 = vset.pattern.permute.xlu0 1
    %906 = vperm.xlu0 %905, %v667
    %v907 = vpop.permute.xlu0 %906
    %v909 = vmul.f32 %v886, %v895
    %v910 = vmul.f32 %v888, %v899
    %v911 = vmul.f32 %v890, %v903
    %v912 = vmul.f32 %v892, %v907
    %913 = vset.pattern.permute.xlu0 2
    %914 = vperm.xlu0 %913, %v664
    %v915 = vpop.permute.xlu0 %914
    %917 = vset.pattern.permute.xlu0 2
    %918 = vperm.xlu0 %917, %v665
    %v919 = vpop.permute.xlu0 %918
    %921 = vset.pattern.permute.xlu0 2
    %922 = vperm.xlu0 %921, %v666
    %v923 = vpop.permute.xlu0 %922
    %925 = vset.pattern.permute.xlu0 2
    %926 = vperm.xlu0 %925, %v667
    %v927 = vpop.permute.xlu0 %926
    %v929 = vadd.f32 %v909, %v915
    %v930 = vadd.f32 %v910, %v919
    %v931 = vadd.f32 %v911, %v923
    %v932 = vadd.f32 %v912, %v927
    %v933 = vsub.f32 0.0, %v929
    %v934 = vsub.f32 0.0, %v930
    %v935 = vsub.f32 0.0, %v931
    %v936 = vsub.f32 0.0, %v932
    %v937 = vmul.f32 %v933, 1.442695
    %v938 = vpow.pop %v937
    %v939 = vmul.f32 %v934, 1.442695
    %v940 = vpow.pop %v939
    %v941 = vmul.f32 %v935, 1.442695
    %v942 = vpow.pop %v941
    %v943 = vmul.f32 %v936, 1.442695
    %v944 = vpow.pop %v943
    %v945 = vadd.f32 %v938, 1.0
    %v946 = vadd.f32 %v940, 1.0
    %v947 = vadd.f32 %v942, 1.0
    %v948 = vadd.f32 %v944, 1.0
    %v949 = vrcp.pop %v945
    %v950 = vrcp.pop %v946
    %v951 = vrcp.pop %v947
    %v952 = vrcp.pop %v948
    %v953 = vmul.f32 %v929, %v949
    %v954 = vmul.f32 %v930, %v950
    %v955 = vmul.f32 %v931, %v951
    %v956 = vmul.f32 %v932, %v952
    %957 = vst.msk [vmem:[#allocation2] sm:$0xff] %vm48, 0
    %958 = vst.msk [vmem:[#allocation2 + $0x8] sm:$0xff] %vm48, 0
    %vm959 = vcmask 277760
    %960 = vst.msk [vmem:[#allocation2] sm:$0xff] %vm959, 0
    %961 = vst.msk [vmem:[#allocation2 + $0x8] sm:$0xff] %vm959, 0
    %v962 = vpack.c.bf16 %v954, %v953
    %v963 = vpack.c.bf16 %v956, %v955
    %966 = vrot.lane.b32.xlu0 %v962, 2
    %v967 = vpop.permute.xlu0 %966
    %968 = vrot.lane.b32.xlu0 %v963, 2
    %v969 = vpop.permute.xlu0 %968
    %vm972 = vcmask 261136
    %973 = vst.msk [vmem:[#allocation2] sm:$0xff] %vm972, %v967
    %974 = vst.msk [vmem:[#allocation2 + $0x8] sm:$0xff] %vm972, %v969
    %v975 = vld [vmem:[#allocation2] sm:$0xff]
    %v976 = vld [vmem:[#allocation2 + $0x8] sm:$0xff]
    %979 = vrot.lane.b32.xlu0 %v975, 126
    %v980 = vpop.permute.xlu0 %979
    %981 = vrot.lane.b32.xlu0 %v976, 126
    %v982 = vpop.permute.xlu0 %981
    %985 = vrot.lane.b32.xlu0 %v975, 124
    %v986 = vpop.permute.xlu0 %985
    %987 = vrot.lane.b32.xlu0 %v976, 124
    %v988 = vpop.permute.xlu0 %987
    %v991 = vld [vmem:[%s1 + $0x60] sm:$0xf]
    %v992 = vld [vmem:[%s1 + $0x68] sm:$0xf]
    %v993 = vld [vmem:[%s1 + $0x70] sm:$0xf]
    %v994 = vld [vmem:[%s1 + $0x78] sm:$0xf]
    %v995 = vld [vmem:[%s1 + $0x80] sm:$0xf]
    %v996 = vld [vmem:[%s1 + $0x88] sm:$0xf]
    %v997 = vld [vmem:[%s1 + $0x90] sm:$0xf]
    %v998 = vld [vmem:[%s1 + $0x98] sm:$0xf]
    %v1007 = vunpack.c.l.b16 %v991
    %v1008 = vunpack.c.l.b16 %v992
    %v1009 = vunpack.c.l.b16 %v993
    %v1010 = vunpack.c.l.b16 %v994
    %v1011 = vunpack.c.l.b16 %v995
    %v1012 = vunpack.c.l.b16 %v996
    %v1013 = vunpack.c.l.b16 %v997
    %v1014 = vunpack.c.l.b16 %v998
    %v1015 = vpack.c.b16 %v1008, %v1007
    %v1016 = vpack.c.b16 %v1010, %v1009
    %v1017 = vpack.c.b16 %v1012, %v1011
    %v1018 = vpack.c.b16 %v1014, %v1013
    %v1020 = vsel %vm698, %v1015, 0
    %v1023 = vsel %vm698, %v1016, 0
    %v1026 = vsel %vm698, %v1017, 0
    %v1029 = vsel %vm698, %v1018, 0
    %1031 = vmatprep.subr.bf16.mxu0 0
    %1032 = vmatpush1.bf16.msra.mxu0 %v975
    %1033 = vmatprep.subr.bf16.mxu0 0
    %1034 = vmatpush1.bf16.msra.mxu0 %v976
    %1035 = vmatprep.subr.bf16.mxu0 0
    %1036 = vmatpush1.bf16.msra.mxu0 %v980
    %1037 = vmatprep.subr.bf16.mxu0 0
    %1038 = vmatpush1.bf16.msra.mxu0 %v982
    %1039 = vmatprep.subr.bf16.mxu0 0
    %1040 = vmatpush1.bf16.msra.mxu0 %v986
    %1041 = vmatprep.subr.bf16.mxu0 0
    %1042 = vmatpush1.bf16.msra.mxu0 %v988
    %1043 = vmatprep.subr.bf16.mxu0 0
    %1044 = vmatpush1.bf16.msra.mxu0 0
    %1045 = vmatprep.subr.bf16.mxu0 0
    %1046 = vmatpush1.bf16.msra.mxu0 0
    %1047 = vmatprep.subr.bf16.mxu0 0
    %1048 = vmatpush1.bf16.msra.mxu0 0
    %1049 = vmatprep.subr.bf16.mxu0 0
    %1050 = vmatpush1.bf16.msra.mxu0 0
    %1051 = vmatprep.subr.bf16.mxu0 0
    %1052 = vmatpush1.bf16.msra.mxu0 0
    %1053 = vmatprep.subr.bf16.mxu0 0
    %1054 = vmatpush1.bf16.msra.mxu0 0
    %1055 = vmatprep.subr.bf16.mxu0 0
    %1056 = vmatpush1.bf16.msra.mxu0 0
    %1057 = vmatprep.subr.bf16.mxu0 0
    %1058 = vmatpush1.bf16.msra.mxu0 0
    %1059 = vmatprep.subr.bf16.mxu0 0
    %1060 = vmatpush1.bf16.msra.mxu0 0
    %1061 = vmatprep.subr.bf16.mxu0 0
    %1062 = vmatpush1.bf16.msra.mxu0 0
    %1063 = vmatprep.mubr.bf16.mxu0 0
    %1064 = vmatmul.mubr.bf16.gmra.mrb[0].mxu0 %v1020
    %v1065 = vpop.f32.mrb[0].mxu0
    %v1066 = vadd.f32 0.0, %v1065
    %v1067 = vpop.f32.mrb[0].mxu0
    %v1068 = vpop.f32.mrb[0].mxu0
    %v1069 = vadd.f32 0.0, %v1068
    %v1070 = vpop.f32.mrb[0].mxu0
    %1071 = vmatprep.mubr.bf16.mxu0 0
    %1072 = vmatmul.mubr.bf16.gmra.mrb[0].mxu0 %v1023
    %v1073 = vpop.f32.mrb[0].mxu0
    %v1074 = vadd.f32 0.0, %v1073
    %v1075 = vpop.f32.mrb[0].mxu0
    %v1076 = vpop.f32.mrb[0].mxu0
    %v1077 = vadd.f32 0.0, %v1076
    %v1078 = vpop.f32.mrb[0].mxu0
    %1079 = vmatprep.mubr.bf16.mxu0 0
    %1080 = vmatmul.mubr.bf16.gmra.mrb[0].mxu0 %v1026
    %v1081 = vpop.f32.mrb[0].mxu0
    %v1082 = vadd.f32 0.0, %v1081
    %v1083 = vpop.f32.mrb[0].mxu0
    %v1084 = vpop.f32.mrb[0].mxu0
    %v1085 = vadd.f32 0.0, %v1084
    %v1086 = vpop.f32.mrb[0].mxu0
    %1087 = vmatprep.mubr.bf16.mxu0 0
    %1088 = vmatmul.mubr.bf16.gmra.mrb[0].mxu0 %v1029
    %v1089 = vpop.f32.mrb[0].mxu0
    %v1090 = vadd.f32 0.0, %v1089
    %v1091 = vpop.f32.mrb[0].mxu0
    %v1092 = vpop.f32.mrb[0].mxu0
    %v1093 = vadd.f32 0.0, %v1092
    %v1094 = vpop.f32.mrb[0].mxu0
    %1095 = vdwg.mxu0
    %v1096 = vld [vmem:[%s2 + $0x60] sm:$0xff]
    %v1097 = vld [vmem:[%s2 + $0x68] sm:$0xff]
    %v1098 = vld [vmem:[%s2 + $0x70] sm:$0xff]
    %v1099 = vld [vmem:[%s2 + $0x78] sm:$0xff]
    %v1100 = vld [vmem:[%s2 + $0x80] sm:$0xff]
    %v1101 = vld [vmem:[%s2 + $0x88] sm:$0xff]
    %v1102 = vld [vmem:[%s2 + $0x90] sm:$0xff]
    %v1103 = vld [vmem:[%s2 + $0x98] sm:$0xff]
    %1105 = vset.pattern.permute.xlu0 1
    %1106 = vperm.xlu0 %1105, %v1096
    %v1107 = vpop.permute.xlu0 %1106
    %1110 = vset.pattern.permute.xlu0 1
    %1111 = vperm.xlu0 %1110, %v1097
    %v1112 = vpop.permute.xlu0 %1111
    %1115 = vset.pattern.permute.xlu0 1
    %1116 = vperm.xlu0 %1115, %v1098
    %v1117 = vpop.permute.xlu0 %1116
    %1120 = vset.pattern.permute.xlu0 1
    %1121 = vperm.xlu0 %1120, %v1099
    %v1122 = vpop.permute.xlu0 %1121
    %1125 = vset.pattern.permute.xlu0 1
    %1126 = vperm.xlu0 %1125, %v1100
    %v1127 = vpop.permute.xlu0 %1126
    %1130 = vset.pattern.permute.xlu0 1
    %1131 = vperm.xlu0 %1130, %v1101
    %v1132 = vpop.permute.xlu0 %1131
    %1135 = vset.pattern.permute.xlu0 1
    %1136 = vperm.xlu0 %1135, %v1102
    %v1137 = vpop.permute.xlu0 %1136
    %1140 = vset.pattern.permute.xlu0 1
    %1141 = vperm.xlu0 %1140, %v1103
    %v1142 = vpop.permute.xlu0 %1141
    %v1144 = vmul.f32 %v1066, %v1107
    %v1145 = vmul.f32 %v1069, %v1112
    %v1146 = vmul.f32 %v1074, %v1117
    %v1147 = vmul.f32 %v1077, %v1122
    %v1148 = vmul.f32 %v1082, %v1127
    %v1149 = vmul.f32 %v1085, %v1132
    %v1150 = vmul.f32 %v1090, %v1137
    %v1151 = vmul.f32 %v1093, %v1142
    %1152 = vset.pattern.permute.xlu0 2
    %1153 = vperm.xlu0 %1152, %v1096
    %v1154 = vpop.permute.xlu0 %1153
    %1156 = vset.pattern.permute.xlu0 2
    %1157 = vperm.xlu0 %1156, %v1097
    %v1158 = vpop.permute.xlu0 %1157
    %1160 = vset.pattern.permute.xlu0 2
    %1161 = vperm.xlu0 %1160, %v1098
    %v1162 = vpop.permute.xlu0 %1161
    %1164 = vset.pattern.permute.xlu0 2
    %1165 = vperm.xlu0 %1164, %v1099
    %v1166 = vpop.permute.xlu0 %1165
    %1168 = vset.pattern.permute.xlu0 2
    %1169 = vperm.xlu0 %1168, %v1100
    %v1170 = vpop.permute.xlu0 %1169
    %1172 = vset.pattern.permute.xlu0 2
    %1173 = vperm.xlu0 %1172, %v1101
    %v1174 = vpop.permute.xlu0 %1173
    %1176 = vset.pattern.permute.xlu0 2
    %1177 = vperm.xlu0 %1176, %v1102
    %v1178 = vpop.permute.xlu0 %1177
    %1180 = vset.pattern.permute.xlu0 2
    %1181 = vperm.xlu0 %1180, %v1103
    %v1182 = vpop.permute.xlu0 %1181
    %v1184 = vadd.f32 %v1144, %v1154
    %v1185 = vadd.f32 %v1145, %v1158
    %v1186 = vadd.f32 %v1146, %v1162
    %v1187 = vadd.f32 %v1147, %v1166
    %v1188 = vadd.f32 %v1148, %v1170
    %v1189 = vadd.f32 %v1149, %v1174
    %v1190 = vadd.f32 %v1150, %v1178
    %v1191 = vadd.f32 %v1151, %v1182
    %v1192 = vsub.f32 0.0, %v1184
    %v1193 = vsub.f32 0.0, %v1185
    %v1194 = vsub.f32 0.0, %v1186
    %v1195 = vsub.f32 0.0, %v1187
    %v1196 = vsub.f32 0.0, %v1188
    %v1197 = vsub.f32 0.0, %v1189
    %v1198 = vsub.f32 0.0, %v1190
    %v1199 = vsub.f32 0.0, %v1191
    %v1200 = vmul.f32 %v1192, 1.442695
    %v1201 = vpow.pop %v1200
    %v1202 = vmul.f32 %v1193, 1.442695
    %v1203 = vpow.pop %v1202
    %v1204 = vmul.f32 %v1194, 1.442695
    %v1205 = vpow.pop %v1204
    %v1206 = vmul.f32 %v1195, 1.442695
    %v1207 = vpow.pop %v1206
    %v1208 = vmul.f32 %v1196, 1.442695
    %v1209 = vpow.pop %v1208
    %v1210 = vmul.f32 %v1197, 1.442695
    %v1211 = vpow.pop %v1210
    %v1212 = vmul.f32 %v1198, 1.442695
    %v1213 = vpow.pop %v1212
    %v1214 = vmul.f32 %v1199, 1.442695
    %v1215 = vpow.pop %v1214
    %v1216 = vadd.f32 %v1201, 1.0
    %v1217 = vadd.f32 %v1203, 1.0
    %v1218 = vadd.f32 %v1205, 1.0
    %v1219 = vadd.f32 %v1207, 1.0
    %v1220 = vadd.f32 %v1209, 1.0
    %v1221 = vadd.f32 %v1211, 1.0
    %v1222 = vadd.f32 %v1213, 1.0
    %v1223 = vadd.f32 %v1215, 1.0
    %v1224 = vrcp.pop %v1216
    %v1225 = vrcp.pop %v1217
    %v1226 = vrcp.pop %v1218
    %v1227 = vrcp.pop %v1219
    %v1228 = vrcp.pop %v1220
    %v1229 = vrcp.pop %v1221
    %v1230 = vrcp.pop %v1222
    %v1231 = vrcp.pop %v1223
    %v1232 = vmul.f32 %v1184, %v1224
    %v1233 = vmul.f32 %v1185, %v1225
    %v1234 = vmul.f32 %v1186, %v1226
    %v1235 = vmul.f32 %v1187, %v1227
    %v1236 = vmul.f32 %v1188, %v1228
    %v1237 = vmul.f32 %v1189, %v1229
    %v1238 = vmul.f32 %v1190, %v1230
    %v1239 = vmul.f32 %v1191, %v1231
    %v1240 = vpack.c.bf16 %v1233, %v1232
    %v1241 = vpack.c.bf16 %v1235, %v1234
    %v1242 = vpack.c.bf16 %v1237, %v1236
    %v1243 = vpack.c.bf16 %v1239, %v1238
    %1248 = vrot.lane.b32.xlu0 %v1240, 126
    %v1249 = vpop.permute.xlu0 %1248
    %1250 = vrot.lane.b32.xlu0 %v1241, 126
    %v1251 = vpop.permute.xlu0 %1250
    %1252 = vrot.lane.b32.xlu0 %v1242, 126
    %v1253 = vpop.permute.xlu0 %1252
    %1254 = vrot.lane.b32.xlu0 %v1243, 126
    %v1255 = vpop.permute.xlu0 %1254
    %1260 = vrot.lane.b32.xlu0 %v1240, 124
    %v1261 = vpop.permute.xlu0 %1260
    %1262 = vrot.lane.b32.xlu0 %v1241, 124
    %v1263 = vpop.permute.xlu0 %1262
    %1264 = vrot.lane.b32.xlu0 %v1242, 124
    %v1265 = vpop.permute.xlu0 %1264
    %1266 = vrot.lane.b32.xlu0 %v1243, 124
    %v1267 = vpop.permute.xlu0 %1266
    %v1272 = vld [vmem:[%s1 + $0xa0] sm:$0xff]
    %v1273 = vld [vmem:[%s1 + $0xa8] sm:$0xff]
    %v1274 = vld [vmem:[%s1 + $0xb0] sm:$0xff]
    %v1275 = vld [vmem:[%s1 + $0xb8] sm:$0xff]
    %v1276 = vld [vmem:[%s1 + $0xc0] sm:$0xff]
    %v1277 = vld [vmem:[%s1 + $0xc8] sm:$0xff]
    %v1278 = vld [vmem:[%s1 + $0xd0] sm:$0xff]
    %v1279 = vld [vmem:[%s1 + $0xd8] sm:$0xff]
    %v1288 = vunpack.c.l.b16 %v1272
    %v1289 = vunpack.c.h.b16 %v1272
    %v1290 = vunpack.c.l.b16 %v1273
    %v1291 = vunpack.c.h.b16 %v1273
    %v1292 = vunpack.c.l.b16 %v1274
    %v1293 = vunpack.c.h.b16 %v1274
    %v1294 = vunpack.c.l.b16 %v1275
    %v1295 = vunpack.c.h.b16 %v1275
    %v1296 = vunpack.c.l.b16 %v1276
    %v1297 = vunpack.c.h.b16 %v1276
    %v1298 = vunpack.c.l.b16 %v1277
    %v1299 = vunpack.c.h.b16 %v1277
    %v1300 = vunpack.c.l.b16 %v1278
    %v1301 = vunpack.c.h.b16 %v1278
    %v1302 = vunpack.c.l.b16 %v1279
    %v1303 = vunpack.c.h.b16 %v1279
    %v1304 = vpack.c.b16 %v1290, %v1288
    %v1305 = vpack.c.b16 %v1291, %v1289
    %v1306 = vpack.c.b16 %v1294, %v1292
    %v1307 = vpack.c.b16 %v1295, %v1293
    %v1308 = vpack.c.b16 %v1298, %v1296
    %v1309 = vpack.c.b16 %v1299, %v1297
    %v1310 = vpack.c.b16 %v1302, %v1300
    %v1311 = vpack.c.b16 %v1303, %v1301
    %vm1316 = vcmask 523264
    %v1318 = vsel %vm1316, %v1305, 0
    %v1321 = vsel %vm1316, %v1307, 0
    %v1324 = vsel %vm1316, %v1309, 0
    %v1327 = vsel %vm1316, %v1311, 0
    %1329 = vmatprep.subr.bf16.mxu0 0
    %1330 = vmatpush1.bf16.msra.mxu0 %v1240
    %1331 = vmatprep.subr.bf16.mxu0 0
    %1332 = vmatpush1.bf16.msra.mxu0 %v1241
    %1333 = vmatprep.subr.bf16.mxu0 0
    %1334 = vmatpush1.bf16.msra.mxu0 %v1242
    %1335 = vmatprep.subr.bf16.mxu0 0
    %1336 = vmatpush1.bf16.msra.mxu0 %v1243
    %1337 = vmatprep.subr.bf16.mxu0 0
    %1338 = vmatpush1.bf16.msra.mxu0 %v1249
    %1339 = vmatprep.subr.bf16.mxu0 0
    %1340 = vmatpush1.bf16.msra.mxu0 %v1251
    %1341 = vmatprep.subr.bf16.mxu0 0
    %1342 = vmatpush1.bf16.msra.mxu0 %v1253
    %1343 = vmatprep.subr.bf16.mxu0 0
    %1344 = vmatpush1.bf16.msra.mxu0 %v1255
    %1345 = vmatprep.subr.bf16.mxu0 0
    %1346 = vmatpush1.bf16.msra.mxu0 %v1261
    %1347 = vmatprep.subr.bf16.mxu0 0
    %1348 = vmatpush1.bf16.msra.mxu0 %v1263
    %1349 = vmatprep.subr.bf16.mxu0 0
    %1350 = vmatpush1.bf16.msra.mxu0 %v1265
    %1351 = vmatprep.subr.bf16.mxu0 0
    %1352 = vmatpush1.bf16.msra.mxu0 %v1267
    %1353 = vmatprep.subr.bf16.mxu0 0
    %1354 = vmatpush1.bf16.msra.mxu0 0
    %1355 = vmatprep.subr.bf16.mxu0 0
    %1356 = vmatpush1.bf16.msra.mxu0 0
    %1357 = vmatprep.subr.bf16.mxu0 0
    %1358 = vmatpush1.bf16.msra.mxu0 0
    %1359 = vmatprep.subr.bf16.mxu0 0
    %1360 = vmatpush1.bf16.msra.mxu0 0
    %1361 = vmatprep.mubr.bf16.mxu0 %v1318
    %1362 = vmatmul.mubr.bf16.gmra.mrb[0].mxu0 %v1304
    %v1363 = vpop.f32.mrb[0].mxu0
    %v1364 = vadd.f32 0.0, %v1363
    %v1365 = vpop.f32.mrb[0].mxu0
    %v1366 = vpop.f32.mrb[0].mxu0
    %v1367 = vadd.f32 0.0, %v1366
    %v1368 = vpop.f32.mrb[0].mxu0
    %1369 = vmatprep.mubr.bf16.mxu0 %v1321
    %1370 = vmatmul.mubr.bf16.gmra.mrb[0].mxu0 %v1306
    %v1371 = vpop.f32.mrb[0].mxu0
    %v1372 = vadd.f32 0.0, %v1371
    %v1373 = vpop.f32.mrb[0].mxu0
    %v1374 = vpop.f32.mrb[0].mxu0
    %v1375 = vadd.f32 0.0, %v1374
    %v1376 = vpop.f32.mrb[0].mxu0
    %1377 = vmatprep.mubr.bf16.mxu0 %v1324
    %1378 = vmatmul.mubr.bf16.gmra.mrb[0].mxu0 %v1308
    %v1379 = vpop.f32.mrb[0].mxu0
    %v1380 = vadd.f32 0.0, %v1379
    %v1381 = vpop.f32.mrb[0].mxu0
    %v1382 = vpop.f32.mrb[0].mxu0
    %v1383 = vadd.f32 0.0, %v1382
    %v1384 = vpop.f32.mrb[0].mxu0
    %1385 = vmatprep.mubr.bf16.mxu0 %v1327
    %1386 = vmatmul.mubr.bf16.gmra.mrb[0].mxu0 %v1310
    %v1387 = vpop.f32.mrb[0].mxu0
    %v1388 = vadd.f32 0.0, %v1387
    %v1389 = vpop.f32.mrb[0].mxu0
    %v1390 = vpop.f32.mrb[0].mxu0
    %v1391 = vadd.f32 0.0, %v1390
    %v1392 = vpop.f32.mrb[0].mxu0
    %1393 = vdwg.mxu0
    %v1394 = vld [vmem:[%s2 + $0xa0] sm:$0xff]
    %v1395 = vld [vmem:[%s2 + $0xa8] sm:$0xff]
    %v1396 = vld [vmem:[%s2 + $0xb0] sm:$0xff]
    %v1397 = vld [vmem:[%s2 + $0xb8] sm:$0xff]
    %v1398 = vld [vmem:[%s2 + $0xc0] sm:$0xff]
    %v1399 = vld [vmem:[%s2 + $0xc8] sm:$0xff]
    %v1400 = vld [vmem:[%s2 + $0xd0] sm:$0xff]
    %v1401 = vld [vmem:[%s2 + $0xd8] sm:$0xff]
    %1403 = vset.pattern.permute.xlu0 1
    %1404 = vperm.xlu0 %1403, %v1394
    %v1405 = vpop.permute.xlu0 %1404
    %1408 = vset.pattern.permute.xlu0 1
    %1409 = vperm.xlu0 %1408, %v1395
    %v1410 = vpop.permute.xlu0 %1409
    %1413 = vset.pattern.permute.xlu0 1
    %1414 = vperm.xlu0 %1413, %v1396
    %v1415 = vpop.permute.xlu0 %1414
    %1418 = vset.pattern.permute.xlu0 1
    %1419 = vperm.xlu0 %1418, %v1397
    %v1420 = vpop.permute.xlu0 %1419
    %1423 = vset.pattern.permute.xlu0 1
    %1424 = vperm.xlu0 %1423, %v1398
    %v1425 = vpop.permute.xlu0 %1424
    %1428 = vset.pattern.permute.xlu0 1
    %1429 = vperm.xlu0 %1428, %v1399
    %v1430 = vpop.permute.xlu0 %1429
    %1433 = vset.pattern.permute.xlu0 1
    %1434 = vperm.xlu0 %1433, %v1400
    %v1435 = vpop.permute.xlu0 %1434
    %1438 = vset.pattern.permute.xlu0 1
    %1439 = vperm.xlu0 %1438, %v1401
    %v1440 = vpop.permute.xlu0 %1439
    %v1442 = vmul.f32 %v1364, %v1405
    %v1443 = vmul.f32 %v1367, %v1410
    %v1444 = vmul.f32 %v1372, %v1415
    %v1445 = vmul.f32 %v1375, %v1420
    %v1446 = vmul.f32 %v1380, %v1425
    %v1447 = vmul.f32 %v1383, %v1430
    %v1448 = vmul.f32 %v1388, %v1435
    %v1449 = vmul.f32 %v1391, %v1440
    %1450 = vset.pattern.permute.xlu0 2
    %1451 = vperm.xlu0 %1450, %v1394
    %v1452 = vpop.permute.xlu0 %1451
    %1454 = vset.pattern.permute.xlu0 2
    %1455 = vperm.xlu0 %1454, %v1395
    %v1456 = vpop.permute.xlu0 %1455
    %1458 = vset.pattern.permute.xlu0 2
    %1459 = vperm.xlu0 %1458, %v1396
    %v1460 = vpop.permute.xlu0 %1459
    %1462 = vset.pattern.permute.xlu0 2
    %1463 = vperm.xlu0 %1462, %v1397
    %v1464 = vpop.permute.xlu0 %1463
    %1466 = vset.pattern.permute.xlu0 2
    %1467 = vperm.xlu0 %1466, %v1398
    %v1468 = vpop.permute.xlu0 %1467
    %1470 = vset.pattern.permute.xlu0 2
    %1471 = vperm.xlu0 %1470, %v1399
    %v1472 = vpop.permute.xlu0 %1471
    %1474 = vset.pattern.permute.xlu0 2
    %1475 = vperm.xlu0 %1474, %v1400
    %v1476 = vpop.permute.xlu0 %1475
    %1478 = vset.pattern.permute.xlu0 2
    %1479 = vperm.xlu0 %1478, %v1401
    %v1480 = vpop.permute.xlu0 %1479
    %v1482 = vadd.f32 %v1442, %v1452
    %v1483 = vadd.f32 %v1443, %v1456
    %v1484 = vadd.f32 %v1444, %v1460
    %v1485 = vadd.f32 %v1445, %v1464
    %v1486 = vadd.f32 %v1446, %v1468
    %v1487 = vadd.f32 %v1447, %v1472
    %v1488 = vadd.f32 %v1448, %v1476
    %v1489 = vadd.f32 %v1449, %v1480
    %v1490 = vsub.f32 0.0, %v1482
    %v1491 = vsub.f32 0.0, %v1483
    %v1492 = vsub.f32 0.0, %v1484
    %v1493 = vsub.f32 0.0, %v1485
    %v1494 = vsub.f32 0.0, %v1486
    %v1495 = vsub.f32 0.0, %v1487
    %v1496 = vsub.f32 0.0, %v1488
    %v1497 = vsub.f32 0.0, %v1489
    %v1498 = vmul.f32 %v1490, 1.442695
    %v1499 = vpow.pop %v1498
    %v1500 = vmul.f32 %v1491, 1.442695
    %v1501 = vpow.pop %v1500
    %v1502 = vmul.f32 %v1492, 1.442695
    %v1503 = vpow.pop %v1502
    %v1504 = vmul.f32 %v1493, 1.442695
    %v1505 = vpow.pop %v1504
    %v1506 = vmul.f32 %v1494, 1.442695
    %v1507 = vpow.pop %v1506
    %v1508 = vmul.f32 %v1495, 1.442695
    %v1509 = vpow.pop %v1508
    %v1510 = vmul.f32 %v1496, 1.442695
    %v1511 = vpow.pop %v1510
    %v1512 = vmul.f32 %v1497, 1.442695
    %v1513 = vpow.pop %v1512
    %v1514 = vadd.f32 %v1499, 1.0
    %v1515 = vadd.f32 %v1501, 1.0
    %v1516 = vadd.f32 %v1503, 1.0
    %v1517 = vadd.f32 %v1505, 1.0
    %v1518 = vadd.f32 %v1507, 1.0
    %v1519 = vadd.f32 %v1509, 1.0
    %v1520 = vadd.f32 %v1511, 1.0
    %v1521 = vadd.f32 %v1513, 1.0
    %v1522 = vrcp.pop %v1514
    %v1523 = vrcp.pop %v1515
    %v1524 = vrcp.pop %v1516
    %v1525 = vrcp.pop %v1517
    %v1526 = vrcp.pop %v1518
    %v1527 = vrcp.pop %v1519
    %v1528 = vrcp.pop %v1520
    %v1529 = vrcp.pop %v1521
    %v1530 = vmul.f32 %v1482, %v1522
    %v1531 = vmul.f32 %v1483, %v1523
    %v1532 = vmul.f32 %v1484, %v1524
    %v1533 = vmul.f32 %v1485, %v1525
    %v1534 = vmul.f32 %v1486, %v1526
    %v1535 = vmul.f32 %v1487, %v1527
    %v1536 = vmul.f32 %v1488, %v1528
    %v1537 = vmul.f32 %v1489, %v1529
    %vm1538 = vcmask 211968
    %1539 = vst.msk [vmem:[%s6] sm:$0xff] %vm1538, %v1530
    %1540 = vst.msk [vmem:[%s6 + $0x8] sm:$0xff] %vm1538, %v1531
    %1541 = vst.msk [vmem:[%s6 + $0x10] sm:$0xff] %vm1538, %v1532
    %1542 = vst.msk [vmem:[%s6 + $0x18] sm:$0xff] %vm1538, %v1533
    %1543 = vst.msk [vmem:[%s6 + $0x20] sm:$0xff] %vm1538, %v1534
    %1544 = vst.msk [vmem:[%s6 + $0x28] sm:$0xff] %vm1538, %v1535
    %1545 = vst.msk [vmem:[%s6 + $0x30] sm:$0xff] %vm1538, %v1536
    %1546 = vst.msk [vmem:[%s6 + $0x38] sm:$0xff] %vm1538, %v1537
    // Predicated region
    $region30: #{cnn1d_middle_forward.1} parent=1 // pred_check
      _
    $region31: #{cnn1d_middle_forward.1} parent=1 // pred_check_branch
      %1548 = sbr.rel (0) target = $region33
    $region32: #{cnn1d_middle_forward.1} parent=1 // pred_region
      _
    $region33: #{cnn1d_middle_forward.1} parent=1 // pred_fallthru
      _
    // Predicated region
    $region34: #{cnn1d_middle_forward.1} parent=1 // pred_check
      _
    $region35: #{cnn1d_middle_forward.1} parent=1 // pred_check_branch
      %1550 = sbr.rel (0) target = $region37
    $region36: #{cnn1d_middle_forward.1} parent=1 // pred_region
      _
    $region37: #{cnn1d_middle_forward.1} parent=1 // pred_fallthru
      _
    %1551 = vsyncpa [#allocation4], 1

</llo_original>
